<compile_context>
chip_gen: v7x
topology: tpu7x:2x2x1
jax: 0.10.0
libtpu: 0.0.40
codegen_flags: <defaults>
</compile_context>

<pallas_src>
import jax
import jax.numpy as jnp
from jax.experimental import pallas as pl
from jax.experimental.pallas import tpu as pltpu

# -----------------------------------------------------------------------------
# Model hyperparameters (small, synthetic — analogous to the parser arguments)
# -----------------------------------------------------------------------------
BATCH = 4          # batch size
SEQ = 8            # encoder sequence length
EMB = 16           # embedding_size
HID = 32           # hidden_size
LAYERS = 2         # num_layers_dec
VOCAB = 24         # len(preprocessed_data['output_index'])
SLAB = 128         # lane-dense result slab width (>= VOCAB + SEQ)
STATE = 2 * LAYERS * HID                          # packed [h | c] slab width (=128)
# per-layer packed [w_ih ; w_hh ; b ; 0-pad] rows, 16-aligned for bf16 sublane tiles
LPAD = ((max(EMB, HID) + HID + 1 + 15) // 16) * 16

_VMEM = pl.BlockSpec(memory_space=pltpu.MemorySpace.VMEM)


# -----------------------------------------------------------------------------
# Fused kernel: embedding gather + stacked LSTM step + dot attention +
#               concat/tanh + fc + log_softmax, single invocation.
# -----------------------------------------------------------------------------
def _fused_decoder_kernel(x_ref, emb_ref, enc_ref, st_ref,
                          lstm_ref, cat_ref, fc_ref,
                          res_ref, st_out_ref):
    B = x_ref.shape[0]

    # ---- embedding lookup in-kernel: one-hot (B,V) @ table (V,EMB) on the MXU
    col = jax.lax.broadcasted_iota(jnp.int32, (B, VOCAB), 1)
    one_hot = (col == x_ref[...]).astype(jnp.bfloat16)                     # (B, V)
    emb = jnp.dot(one_hot, emb_ref[...],
                  preferred_element_type=jnp.float32)                      # (B, EMB)

    # ---- stacked LSTM cell (one time step), PyTorch gate order i, f, g, o ----
    st = st_ref[...]                       # (B, 2*L*H) = [h_0..h_{L-1} | c_0..c_{L-1}]
    ones_col = jnp.ones((B, 1), jnp.bfloat16)
    x = emb
    new_h, new_c = [], []
    for l in range(LAYERS):
        in_dim = EMB if l == 0 else HID
        used = in_dim + HID + 1
        w = lstm_ref[l * LPAD:(l + 1) * LPAD, :]          # (LPAD, 4H) bf16
        h = st[:, l * HID:(l + 1) * HID]                  # (B, H) f32
        c = st[:, (LAYERS + l) * HID:(LAYERS + l + 1) * HID]
        xh1 = jnp.concatenate(
            [x.astype(jnp.bfloat16), h.astype(jnp.bfloat16), ones_col,
             jnp.zeros((B, LPAD - used), jnp.bfloat16)], axis=1)           # (B, LPAD)
        gates = jnp.dot(xh1, w, preferred_element_type=jnp.float32)        # (B, 4H)

        sig = jax.nn.sigmoid(gates)                        # one pass over full 4H
        i_g = sig[:, 0 * HID:1 * HID]
        f_g = sig[:, 1 * HID:2 * HID]
        o_g = sig[:, 3 * HID:4 * HID]
        g_g = jnp.tanh(gates[:, 2 * HID:3 * HID])

        c_new = f_g * c + i_g * g_g
        h_new = o_g * jnp.tanh(c_new)
        new_h.append(h_new)
        new_c.append(c_new)
        x = h_new                                          # inter-layer dropout = id

    out = x                                                # (B, H) top-layer output

    # ---- dot attention on the lane-dense (B, S*H) encoder layout (f32, exact) ----
    enc = enc_ref[...]                                     # (B, S*H)
    # scores[b,s] = sum_h out[b,h] * enc[b, s*H+h]  via segment-matrix MXU matmul
    out_rep = jnp.concatenate([out] * SEQ, axis=1)         # (B, S*H)
    j = jax.lax.broadcasted_iota(jnp.int32, (SEQ * HID, SEQ), 0)
    s = jax.lax.broadcasted_iota(jnp.int32, (SEQ * HID, SEQ), 1)
    seg_js = ((j >= s * HID) & (j < (s + 1) * HID)).astype(jnp.float32)    # (S*H, S)
    scores = jnp.dot(enc * out_rep, seg_js,
                     preferred_element_type=jnp.float32)                   # (B, S)

    m = jnp.max(scores, axis=1, keepdims=True)
    e = jnp.exp(scores - m)
    attn = e / jnp.sum(e, axis=1, keepdims=True)           # exact divide (feeds logits)

    # context[b,h] = sum_s attn[b,s] * enc[b, s*H+h]
    s2 = jax.lax.broadcasted_iota(jnp.int32, (SEQ, SEQ * HID), 0)
    j2 = jax.lax.broadcasted_iota(jnp.int32, (SEQ, SEQ * HID), 1)
    seg_sj = ((j2 >= s2 * HID) & (j2 < (s2 + 1) * HID)).astype(jnp.float32)  # (S, S*H)
    attn_rep = jnp.dot(attn, seg_sj, preferred_element_type=jnp.float32)     # (B, S*H)

    j3 = jax.lax.broadcasted_iota(jnp.int32, (SEQ * HID, HID), 0)
    h3 = jax.lax.broadcasted_iota(jnp.int32, (SEQ * HID, HID), 1)
    gm = (j3 == h3)
    for si in range(1, SEQ):
        gm = gm | (j3 == h3 + si * HID)
    gather_jh = gm.astype(jnp.float32)                                       # (S*H, H)
    context = jnp.dot(attn_rep * enc, gather_jh,
                      preferred_element_type=jnp.float32)                    # (B, H)

    # ---- concat -> Linear -> tanh -> fc -> log_softmax (bias fused via ones col) ----
    cat_in = jnp.concatenate([out.astype(jnp.bfloat16),
                              context.astype(jnp.bfloat16), ones_col], axis=1)  # (B,2H+1)
    concat_out = jnp.tanh(jnp.dot(cat_in, cat_ref[...],
                                  preferred_element_type=jnp.float32))           # (B, H)
    fc_in = jnp.concatenate([concat_out.astype(jnp.bfloat16), ones_col], axis=1)  # (B,H+1)
    logits = jnp.dot(fc_in, fc_ref[...], preferred_element_type=jnp.float32)      # (B, V)
    shifted = logits - jnp.max(logits, axis=1, keepdims=True)
    logp = shifted - jnp.log(jnp.sum(jnp.exp(shifted), axis=1, keepdims=True))

    # ---- two lane-dense (B,128) stores: results + updated state slab ----
    pad = jnp.zeros((B, SLAB - VOCAB - SEQ), jnp.float32)
    res_ref[...] = jnp.concatenate([logp, attn, pad], axis=1)        # (B, SLAB)
    st_out_ref[...] = jnp.concatenate(new_h + new_c, axis=1)         # (B, 2*L*H)


def fused_decoder_step(x_idx, enc_lane, state, params):
    """Hot-loop API.

    x_idx   : (B,) int32
    enc_lane: (B, S*H) f32   -- loop-invariant across decode steps: prepare ONCE
    state   : (B, 2*L*H) f32 -- packed [h_0..h_{L-1} | c_0..c_{L-1}]; this buffer
              is DONATED (aliased with the new state output) — do not reuse it.
    Returns (result_slab (B, SLAB), new_state (B, 2*L*H)).
    """
    B = state.shape[0]
    res, new_state = pl.pallas_call(
        _fused_decoder_kernel,
        out_shape=(jax.ShapeDtypeStruct((B, SLAB), jnp.float32),
                   jax.ShapeDtypeStruct((B, STATE), jnp.float32)),
        in_specs=[_VMEM] * 7,
        out_specs=(_VMEM, _VMEM),
        input_output_aliases={3: 1},   # state slab updated in place
    )(x_idx.reshape(B, 1).astype(jnp.int32), params['emb_tab'], enc_lane, state,
      params['lstm_pack'], params['cat_pack'], params['fc_pack'])
    return res, new_state


# -----------------------------------------------------------------------------
# Parameter construction: weights created in PyTorch layouts, then packed /
# pre-transposed ONCE into the kernel's bf16 lane-dense slabs.
# -----------------------------------------------------------------------------
def init_params(key):
    ks = jax.random.split(key, 4 + LAYERS)
    emb_tab = 0.1 * jax.random.normal(ks[0], (VOCAB, EMB), jnp.float32)

    blocks = []
    for l in range(LAYERS):
        in_dim = EMB if l == 0 else HID
        k0, k1, k2, k3 = jax.random.split(ks[1 + l], 4)
        w_ih = 0.1 * jax.random.normal(k0, (4 * HID, in_dim), jnp.float32)  # torch layout
        w_hh = 0.1 * jax.random.normal(k1, (4 * HID, HID), jnp.float32)
        b_ih = 0.1 * jax.random.normal(k2, (4 * HID,), jnp.float32)
        b_hh = 0.1 * jax.random.normal(k3, (4 * HID,), jnp.float32)
        blk = jnp.zeros((LPAD, 4 * HID), jnp.float32)
        blk = blk.at[:in_dim].set(w_ih.T)                       # rows: x features
        blk = blk.at[in_dim:in_dim + HID].set(w_hh.T)           # rows: h features
        blk = blk.at[in_dim + HID].set(b_ih + b_hh)             # row : fused bias
        blocks.append(blk)
    lstm_pack = jnp.concatenate(blocks, axis=0)                 # (L*LPAD, 4H)

    kc, kcb = jax.random.split(ks[1 + LAYERS], 2)
    concat_w = 0.1 * jax.random.normal(kc, (HID, 2 * HID), jnp.float32)
    concat_b = 0.1 * jax.random.normal(kcb, (HID,), jnp.float32)
    cat_pack = jnp.concatenate([concat_w.T, concat_b[None, :]], axis=0)   # (2H+1, H)

    kf, kfb = jax.random.split(ks[2 + LAYERS], 2)
    fc_w = 0.1 * jax.random.normal(kf, (VOCAB, HID), jnp.float32)
    fc_b = 0.1 * jax.random.normal(kfb, (VOCAB,), jnp.float32)
    fc_pack = jnp.concatenate([fc_w.T, fc_b[None, :]], axis=0)            # (H+1, V)

    return {
        'emb_tab': emb_tab.astype(jnp.bfloat16),
        'lstm_pack': lstm_pack.astype(jnp.bfloat16),
        'cat_pack': cat_pack.astype(jnp.bfloat16),
        'fc_pack': fc_pack.astype(jnp.bfloat16),
    }


# -----------------------------------------------------------------------------
# PyTorch-signature forward (single decode step).  The relayouts below are
# loop-invariant / tiny glue; a real decode loop should call fused_decoder_step
# directly with the packed state slab to avoid per-step packing.
# -----------------------------------------------------------------------------
@jax.jit
def decoder_attention_forward(params, x_idx, encoder_states, hidden, cell):
    L, B, H = hidden.shape
    S = encoder_states.shape[0]

    enc_lane = jnp.transpose(encoder_states, (1, 0, 2)).reshape(B, S * H)
    state = jnp.concatenate(
        [jnp.transpose(hidden, (1, 0, 2)).reshape(B, L * H),
         jnp.transpose(cell, (1, 0, 2)).reshape(B, L * H)], axis=1)

    res, new_state = fused_decoder_step(x_idx, enc_lane, state, params)

    log_probs = res[:, :VOCAB]
    attn_w = res[:, VOCAB:VOCAB + S]
    h_new = jnp.transpose(new_state[:, :L * H].reshape(B, L, H), (1, 0, 2))
    c_new = jnp.transpose(new_state[:, L * H:].reshape(B, L, H), (1, 0, 2))
    return log_probs, h_new, c_new, attn_w


# -----------------------------------------------------------------------------
# Pure-JAX reference (same bf16-rounded weights, f32 math) for validation.
# -----------------------------------------------------------------------------
def reference_forward(params, x_idx, encoder_states, hidden, cell):
    emb_tab = params['emb_tab'].astype(jnp.float32)
    lstm = params['lstm_pack'].astype(jnp.float32)
    cat_p = params['cat_pack'].astype(jnp.float32)
    fc_p = params['fc_pack'].astype(jnp.float32)

    x = emb_tab[x_idx]
    h_new, c_new = [], []
    for l in range(LAYERS):
        in_dim = EMB if l == 0 else HID
        blk = lstm[l * LPAD:(l + 1) * LPAD]
        w_ih, w_hh, b = blk[:in_dim], blk[in_dim:in_dim + HID], blk[in_dim + HID]
        gates = x @ w_ih + hidden[l] @ w_hh + b
        i = jax.nn.sigmoid(gates[:, :HID])
        f = jax.nn.sigmoid(gates[:, HID:2 * HID])
        g = jnp.tanh(gates[:, 2 * HID:3 * HID])
        o = jax.nn.sigmoid(gates[:, 3 * HID:4 * HID])
        c = f * cell[l] + i * g
        h = o * jnp.tanh(c)
        h_new.append(h)
        c_new.append(c)
        x = h
    out = x
    scores = jnp.einsum('bh,sbh->bs', out, encoder_states)
    attn = jax.nn.softmax(scores, axis=1)
    context = jnp.einsum('bs,sbh->bh', attn, encoder_states)
    concat_out = jnp.tanh(jnp.concatenate([out, context], axis=1) @ cat_p[:2 * HID]
                          + cat_p[2 * HID])
    logits = concat_out @ fc_p[:HID] + fc_p[HID]
    logp = jax.nn.log_softmax(logits, axis=1)
    return logp, jnp.stack(h_new), jnp.stack(c_new), attn


# -----------------------------------------------------------------------------
if __name__ == "__main__":
    key = jax.random.PRNGKey(0)
    k_par, k_x, k_enc, k_h, k_c = jax.random.split(key, 5)

    params = init_params(k_par)

    x_idx = jax.random.randint(k_x, (BATCH,), 0, VOCAB, dtype=jnp.int32)
    encoder_states = jax.random.normal(k_enc, (SEQ, BATCH, HID), jnp.float32)
    hidden0 = jax.random.normal(k_h, (LAYERS, BATCH, HID), jnp.float32)
    cell0 = jax.random.normal(k_c, (LAYERS, BATCH, HID), jnp.float32)

    log_probs, hidden1, cell1, attn_w = decoder_attention_forward(
        params, x_idx, encoder_states, hidden0, cell0)
    jax.block_until_ready((log_probs, hidden1, cell1, attn_w))

    # shape + structural sanity
    assert log_probs.shape == (BATCH, VOCAB)
    assert hidden1.shape == (LAYERS, BATCH, HID)
    assert cell1.shape == (LAYERS, BATCH, HID)
    assert attn_w.shape == (BATCH, SEQ)
    assert jnp.allclose(jnp.sum(jnp.exp(log_probs), axis=1), 1.0, atol=1e-4)
    assert jnp.allclose(jnp.sum(attn_w, axis=1), 1.0, atol=1e-4)

    # numerical check vs. pure-JAX reference (bf16 activation rounding only)
    r_lp, r_h, r_c, r_attn = reference_forward(
        params, x_idx, encoder_states, hidden0, cell0)
    assert jnp.allclose(log_probs, r_lp, atol=3e-2), float(jnp.abs(log_probs - r_lp).max())
    assert jnp.allclose(attn_w, r_attn, atol=3e-2), float(jnp.abs(attn_w - r_attn).max())
    assert jnp.allclose(hidden1, r_h, atol=3e-2), float(jnp.abs(hidden1 - r_h).max())
    assert jnp.allclose(cell1, r_c, atol=3e-2), float(jnp.abs(cell1 - r_c).max())

    print("KERNEL_OK")
</pallas_src>

<mosaic_0001>
module attributes {stable_mosaic.version = 11 : i64} {
  func.func @_fused_decoder_kernel(%arg0: memref<4x1xi32, #tpu.memory_space<vmem>>, %arg1: memref<24x16xbf16, #tpu.memory_space<vmem>>, %arg2: memref<4x256xf32, #tpu.memory_space<vmem>>, %arg3: memref<4x128xf32, #tpu.memory_space<vmem>>, %arg4: memref<160x128xbf16, #tpu.memory_space<vmem>>, %arg5: memref<65x32xbf16, #tpu.memory_space<vmem>>, %arg6: memref<33x24xbf16, #tpu.memory_space<vmem>>, %arg7: memref<4x128xf32, #tpu.memory_space<vmem>>, %arg8: memref<4x128xf32, #tpu.memory_space<vmem>>) attributes {dimension_semantics = [], scalar_prefetch = 0 : i64, scratch_operands = 0 : i64, tpu.core_type = #tpu.core_type<tc>} {
    %0 = tpu.iota {dimensions = array<i32: 1>} : vector<4x24xi32>
    %c0 = arith.constant 0 : index
    %c0_0 = arith.constant 0 : index
    %1 = vector.load %arg0[%c0, %c0_0] : memref<4x1xi32, #tpu.memory_space<vmem>>, vector<4x1xi32>
    %2 = vector.broadcast %1 : vector<4x1xi32> to vector<4x24xi32>
    %3 = arith.cmpi eq, %0, %2 : vector<4x24xi32>
    %4 = arith.extui %3 : vector<4x24xi1> to vector<4x24xi32>
    %5 = arith.sitofp %4 : vector<4x24xi32> to vector<4x24xf32>
    %6 = arith.truncf %5 : vector<4x24xf32> to vector<4x24xbf16>
    %c0_1 = arith.constant 0 : index
    %c0_2 = arith.constant 0 : index
    %7 = vector.load %arg1[%c0_1, %c0_2] : memref<24x16xbf16, #tpu.memory_space<vmem>>, vector<24x16xbf16>
    %cst = arith.constant dense<0.000000e+00> : vector<4x16xf32>
    %8 = tpu.matmul %6, %7, %cst {dimension_numbers = #tpu.dot_dimension_numbers<[1], [0], [0], [1], [0, 0, 1, 1], [], []>} : vector<4x24xbf16>, vector<24x16xbf16>, vector<4x16xf32> -> vector<4x16xf32>
    %c0_3 = arith.constant 0 : index
    %c0_4 = arith.constant 0 : index
    %9 = vector.load %arg3[%c0_3, %c0_4] : memref<4x128xf32, #tpu.memory_space<vmem>>, vector<4x128xf32>
    %cst_5 = arith.constant 1.000000e+00 : bf16
    %10 = vector.broadcast %cst_5 : bf16 to vector<4x1xbf16>
    %c0_6 = arith.constant 0 : index
    %c0_7 = arith.constant 0 : index
    %11 = vector.load %arg4[%c0_6, %c0_7] : memref<160x128xbf16, #tpu.memory_space<vmem>>, vector<80x128xbf16>
    %12 = vector.extract_strided_slice %9 {offsets = [0, 0], sizes = [4, 32], strides = [1, 1]} : vector<4x128xf32> to vector<4x32xf32>
    %13 = vector.extract_strided_slice %9 {offsets = [0, 64], sizes = [4, 32], strides = [1, 1]} : vector<4x128xf32> to vector<4x32xf32>
    %14 = arith.truncf %8 : vector<4x16xf32> to vector<4x16xbf16>
    %15 = arith.truncf %12 : vector<4x32xf32> to vector<4x32xbf16>
    %cst_8 = arith.constant 0.000000e+00 : bf16
    %16 = vector.broadcast %cst_8 : bf16 to vector<4x31xbf16>
    %17 = tpu.concatenate %14, %15, %10, %16 in 1 : vector<4x16xbf16>, vector<4x32xbf16>, vector<4x1xbf16>, vector<4x31xbf16> -> vector<4x80xbf16>
    %cst_9 = arith.constant dense<0.000000e+00> : vector<4x128xf32>
    %18 = tpu.matmul %17, %11, %cst_9 {dimension_numbers = #tpu.dot_dimension_numbers<[1], [0], [0], [1], [0, 0, 1, 1], [], []>} : vector<4x80xbf16>, vector<80x128xbf16>, vector<4x128xf32> -> vector<4x128xf32>
    %19 = arith.negf %18 : vector<4x128xf32>
    %20 = math.exp %19 : vector<4x128xf32>
    %cst_10 = arith.constant 1.000000e+00 : f32
    %21 = vector.broadcast %cst_10 : f32 to vector<4x128xf32>
    %22 = arith.addf %21, %20 : vector<4x128xf32>
    %23 = arith.divf %21, %22 : vector<4x128xf32>
    %24 = vector.extract_strided_slice %23 {offsets = [0, 0], sizes = [4, 32], strides = [1, 1]} : vector<4x128xf32> to vector<4x32xf32>
    %25 = vector.extract_strided_slice %23 {offsets = [0, 32], sizes = [4, 32], strides = [1, 1]} : vector<4x128xf32> to vector<4x32xf32>
    %26 = vector.extract_strided_slice %23 {offsets = [0, 96], sizes = [4, 32], strides = [1, 1]} : vector<4x128xf32> to vector<4x32xf32>
    %27 = vector.extract_strided_slice %18 {offsets = [0, 64], sizes = [4, 32], strides = [1, 1]} : vector<4x128xf32> to vector<4x32xf32>
    %28 = math.tanh %27 : vector<4x32xf32>
    %29 = arith.mulf %25, %13 : vector<4x32xf32>
    %30 = arith.mulf %24, %28 : vector<4x32xf32>
    %31 = arith.addf %29, %30 : vector<4x32xf32>
    %32 = math.tanh %31 : vector<4x32xf32>
    %33 = arith.mulf %26, %32 : vector<4x32xf32>
    %c80 = arith.constant 80 : index
    %c0_11 = arith.constant 0 : index
    %34 = vector.load %arg4[%c80, %c0_11] : memref<160x128xbf16, #tpu.memory_space<vmem>>, vector<80x128xbf16>
    %35 = vector.extract_strided_slice %9 {offsets = [0, 32], sizes = [4, 32], strides = [1, 1]} : vector<4x128xf32> to vector<4x32xf32>
    %36 = vector.extract_strided_slice %9 {offsets = [0, 96], sizes = [4, 32], strides = [1, 1]} : vector<4x128xf32> to vector<4x32xf32>
    %37 = arith.truncf %33 : vector<4x32xf32> to vector<4x32xbf16>
    %38 = arith.truncf %35 : vector<4x32xf32> to vector<4x32xbf16>
    %cst_12 = arith.constant 0.000000e+00 : bf16
    %39 = vector.broadcast %cst_12 : bf16 to vector<4x15xbf16>
    %40 = tpu.concatenate %37, %38, %10, %39 in 1 : vector<4x32xbf16>, vector<4x32xbf16>, vector<4x1xbf16>, vector<4x15xbf16> -> vector<4x80xbf16>
    %cst_13 = arith.constant dense<0.000000e+00> : vector<4x128xf32>
    %41 = tpu.matmul %40, %34, %cst_13 {dimension_numbers = #tpu.dot_dimension_numbers<[1], [0], [0], [1], [0, 0, 1, 1], [], []>} : vector<4x80xbf16>, vector<80x128xbf16>, vector<4x128xf32> -> vector<4x128xf32>
    %42 = arith.negf %41 : vector<4x128xf32>
    %43 = math.exp %42 : vector<4x128xf32>
    %cst_14 = arith.constant 1.000000e+00 : f32
    %44 = vector.broadcast %cst_14 : f32 to vector<4x128xf32>
    %45 = arith.addf %44, %43 : vector<4x128xf32>
    %46 = arith.divf %44, %45 : vector<4x128xf32>
    %47 = vector.extract_strided_slice %46 {offsets = [0, 0], sizes = [4, 32], strides = [1, 1]} : vector<4x128xf32> to vector<4x32xf32>
    %48 = vector.extract_strided_slice %46 {offsets = [0, 32], sizes = [4, 32], strides = [1, 1]} : vector<4x128xf32> to vector<4x32xf32>
    %49 = vector.extract_strided_slice %46 {offsets = [0, 96], sizes = [4, 32], strides = [1, 1]} : vector<4x128xf32> to vector<4x32xf32>
    %50 = vector.extract_strided_slice %41 {offsets = [0, 64], sizes = [4, 32], strides = [1, 1]} : vector<4x128xf32> to vector<4x32xf32>
    %51 = math.tanh %50 : vector<4x32xf32>
    %52 = arith.mulf %48, %36 : vector<4x32xf32>
    %53 = arith.mulf %47, %51 : vector<4x32xf32>
    %54 = arith.addf %52, %53 : vector<4x32xf32>
    %55 = math.tanh %54 : vector<4x32xf32>
    %56 = arith.mulf %49, %55 : vector<4x32xf32>
    %c0_15 = arith.constant 0 : index
    %c0_16 = arith.constant 0 : index
    %57 = vector.load %arg2[%c0_15, %c0_16] : memref<4x256xf32, #tpu.memory_space<vmem>>, vector<4x256xf32>
    %58 = tpu.concatenate %56, %56, %56, %56, %56, %56, %56, %56 in 1 : vector<4x32xf32>, vector<4x32xf32>, vector<4x32xf32>, vector<4x32xf32>, vector<4x32xf32>, vector<4x32xf32>, vector<4x32xf32>, vector<4x32xf32> -> vector<4x256xf32>
    %59 = tpu.iota {dimensions = array<i32: 0>} : vector<256x8xi32>
    %60 = tpu.iota {dimensions = array<i32: 1>} : vector<256x8xi32>
    %c32_i32 = arith.constant 32 : i32
    %61 = vector.broadcast %c32_i32 : i32 to vector<256x8xi32>
    %62 = arith.muli %60, %61 : vector<256x8xi32>
    %63 = arith.cmpi sge, %59, %62 : vector<256x8xi32>
    %c1_i32 = arith.constant 1 : i32
    %64 = vector.broadcast %c1_i32 : i32 to vector<256x8xi32>
    %65 = arith.addi %60, %64 : vector<256x8xi32>
    %c32_i32_17 = arith.constant 32 : i32
    %66 = vector.broadcast %c32_i32_17 : i32 to vector<256x8xi32>
    %67 = arith.muli %65, %66 : vector<256x8xi32>
    %68 = arith.cmpi slt, %59, %67 : vector<256x8xi32>
    %69 = arith.andi %63, %68 : vector<256x8xi1>
    %70 = arith.extui %69 : vector<256x8xi1> to vector<256x8xi32>
    %71 = arith.sitofp %70 : vector<256x8xi32> to vector<256x8xf32>
    %72 = arith.mulf %57, %58 : vector<4x256xf32>
    %cst_18 = arith.constant dense<0.000000e+00> : vector<4x8xf32>
    %73 = tpu.matmul %72, %71, %cst_18 {dimension_numbers = #tpu.dot_dimension_numbers<[1], [0], [0], [1], [0, 0, 1, 1], [], []>} : vector<4x256xf32>, vector<256x8xf32>, vector<4x8xf32> -> vector<4x8xf32>
    %cst_19 = arith.constant dense<0xFF800000> : vector<4xf32>
    %74 = vector.multi_reduction <maximumf>, %73, %cst_19 [1] : vector<4x8xf32> to vector<4xf32>
    %75 = vector.shape_cast %74 : vector<4xf32> to vector<4x1xf32>
    %76 = vector.broadcast %75 : vector<4x1xf32> to vector<4x8xf32>
    %77 = arith.subf %73, %76 : vector<4x8xf32>
    %78 = math.exp %77 : vector<4x8xf32>
    %cst_20 = arith.constant dense<0.000000e+00> : vector<4xf32>
    %79 = vector.multi_reduction <add>, %78, %cst_20 [1] : vector<4x8xf32> to vector<4xf32>
    %80 = vector.shape_cast %79 : vector<4xf32> to vector<4x1xf32>
    %81 = vector.broadcast %80 : vector<4x1xf32> to vector<4x8xf32>
    %82 = arith.divf %78, %81 : vector<4x8xf32>
    %83 = tpu.iota {dimensions = array<i32: 0>} : vector<8x256xi32>
    %84 = tpu.iota {dimensions = array<i32: 1>} : vector<8x256xi32>
    %c32_i32_21 = arith.constant 32 : i32
    %85 = vector.broadcast %c32_i32_21 : i32 to vector<8x256xi32>
    %86 = arith.muli %83, %85 : vector<8x256xi32>
    %87 = arith.cmpi sge, %84, %86 : vector<8x256xi32>
    %c1_i32_22 = arith.constant 1 : i32
    %88 = vector.broadcast %c1_i32_22 : i32 to vector<8x256xi32>
    %89 = arith.addi %83, %88 : vector<8x256xi32>
    %c32_i32_23 = arith.constant 32 : i32
    %90 = vector.broadcast %c32_i32_23 : i32 to vector<8x256xi32>
    %91 = arith.muli %89, %90 : vector<8x256xi32>
    %92 = arith.cmpi slt, %84, %91 : vector<8x256xi32>
    %93 = arith.andi %87, %92 : vector<8x256xi1>
    %94 = arith.extui %93 : vector<8x256xi1> to vector<8x256xi32>
    %95 = arith.sitofp %94 : vector<8x256xi32> to vector<8x256xf32>
    %cst_24 = arith.constant dense<0.000000e+00> : vector<4x256xf32>
    %96 = tpu.matmul %82, %95, %cst_24 {dimension_numbers = #tpu.dot_dimension_numbers<[1], [0], [0], [1], [0, 0, 1, 1], [], []>} : vector<4x8xf32>, vector<8x256xf32>, vector<4x256xf32> -> vector<4x256xf32>
    %97 = tpu.iota {dimensions = array<i32: 0>} : vector<256x32xi32>
    %98 = tpu.iota {dimensions = array<i32: 1>} : vector<256x32xi32>
    %99 = arith.cmpi eq, %97, %98 : vector<256x32xi32>
    %c32_i32_25 = arith.constant 32 : i32
    %100 = vector.broadcast %c32_i32_25 : i32 to vector<256x32xi32>
    %101 = arith.addi %98, %100 : vector<256x32xi32>
    %102 = arith.cmpi eq, %97, %101 : vector<256x32xi32>
    %103 = arith.ori %99, %102 : vector<256x32xi1>
    %c64_i32 = arith.constant 64 : i32
    %104 = vector.broadcast %c64_i32 : i32 to vector<256x32xi32>
    %105 = arith.addi %98, %104 : vector<256x32xi32>
    %106 = arith.cmpi eq, %97, %105 : vector<256x32xi32>
    %107 = arith.ori %103, %106 : vector<256x32xi1>
    %c96_i32 = arith.constant 96 : i32
    %108 = vector.broadcast %c96_i32 : i32 to vector<256x32xi32>
    %109 = arith.addi %98, %108 : vector<256x32xi32>
    %110 = arith.cmpi eq, %97, %109 : vector<256x32xi32>
    %111 = arith.ori %107, %110 : vector<256x32xi1>
    %c128_i32 = arith.constant 128 : i32
    %112 = vector.broadcast %c128_i32 : i32 to vector<256x32xi32>
    %113 = arith.addi %98, %112 : vector<256x32xi32>
    %114 = arith.cmpi eq, %97, %113 : vector<256x32xi32>
    %115 = arith.ori %111, %114 : vector<256x32xi1>
    %c160_i32 = arith.constant 160 : i32
    %116 = vector.broadcast %c160_i32 : i32 to vector<256x32xi32>
    %117 = arith.addi %98, %116 : vector<256x32xi32>
    %118 = arith.cmpi eq, %97, %117 : vector<256x32xi32>
    %119 = arith.ori %115, %118 : vector<256x32xi1>
    %c192_i32 = arith.constant 192 : i32
    %120 = vector.broadcast %c192_i32 : i32 to vector<256x32xi32>
    %121 = arith.addi %98, %120 : vector<256x32xi32>
    %122 = arith.cmpi eq, %97, %121 : vector<256x32xi32>
    %123 = arith.ori %119, %122 : vector<256x32xi1>
    %c224_i32 = arith.constant 224 : i32
    %124 = vector.broadcast %c224_i32 : i32 to vector<256x32xi32>
    %125 = arith.addi %98, %124 : vector<256x32xi32>
    %126 = arith.cmpi eq, %97, %125 : vector<256x32xi32>
    %127 = arith.ori %123, %126 : vector<256x32xi1>
    %128 = arith.extui %127 : vector<256x32xi1> to vector<256x32xi32>
    %129 = arith.sitofp %128 : vector<256x32xi32> to vector<256x32xf32>
    %130 = arith.mulf %96, %57 : vector<4x256xf32>
    %cst_26 = arith.constant dense<0.000000e+00> : vector<4x32xf32>
    %131 = tpu.matmul %130, %129, %cst_26 {dimension_numbers = #tpu.dot_dimension_numbers<[1], [0], [0], [1], [0, 0, 1, 1], [], []>} : vector<4x256xf32>, vector<256x32xf32>, vector<4x32xf32> -> vector<4x32xf32>
    %132 = arith.truncf %56 : vector<4x32xf32> to vector<4x32xbf16>
    %133 = arith.truncf %131 : vector<4x32xf32> to vector<4x32xbf16>
    %134 = tpu.concatenate %132, %133, %10 in 1 : vector<4x32xbf16>, vector<4x32xbf16>, vector<4x1xbf16> -> vector<4x65xbf16>
    %c0_27 = arith.constant 0 : index
    %c0_28 = arith.constant 0 : index
    %135 = vector.load %arg5[%c0_27, %c0_28] : memref<65x32xbf16, #tpu.memory_space<vmem>>, vector<65x32xbf16>
    %cst_29 = arith.constant dense<0.000000e+00> : vector<4x32xf32>
    %136 = tpu.matmul %134, %135, %cst_29 {dimension_numbers = #tpu.dot_dimension_numbers<[1], [0], [0], [1], [0, 0, 1, 1], [], []>} : vector<4x65xbf16>, vector<65x32xbf16>, vector<4x32xf32> -> vector<4x32xf32>
    %137 = math.tanh %136 : vector<4x32xf32>
    %138 = arith.truncf %137 : vector<4x32xf32> to vector<4x32xbf16>
    %139 = tpu.concatenate %138, %10 in 1 : vector<4x32xbf16>, vector<4x1xbf16> -> vector<4x33xbf16>
    %c0_30 = arith.constant 0 : index
    %c0_31 = arith.constant 0 : index
    %140 = vector.load %arg6[%c0_30, %c0_31] : memref<33x24xbf16, #tpu.memory_space<vmem>>, vector<33x24xbf16>
    %cst_32 = arith.constant dense<0.000000e+00> : vector<4x24xf32>
    %141 = tpu.matmul %139, %140, %cst_32 {dimension_numbers = #tpu.dot_dimension_numbers<[1], [0], [0], [1], [0, 0, 1, 1], [], []>} : vector<4x33xbf16>, vector<33x24xbf16>, vector<4x24xf32> -> vector<4x24xf32>
    %cst_33 = arith.constant dense<0xFF800000> : vector<4xf32>
    %142 = vector.multi_reduction <maximumf>, %141, %cst_33 [1] : vector<4x24xf32> to vector<4xf32>
    %143 = vector.shape_cast %142 : vector<4xf32> to vector<4x1xf32>
    %144 = vector.broadcast %143 : vector<4x1xf32> to vector<4x24xf32>
    %145 = arith.subf %141, %144 : vector<4x24xf32>
    %146 = math.exp %145 : vector<4x24xf32>
    %cst_34 = arith.constant dense<0.000000e+00> : vector<4xf32>
    %147 = vector.multi_reduction <add>, %146, %cst_34 [1] : vector<4x24xf32> to vector<4xf32>
    %148 = vector.shape_cast %147 : vector<4xf32> to vector<4x1xf32>
    %149 = math.log %148 : vector<4x1xf32>
    %150 = vector.broadcast %149 : vector<4x1xf32> to vector<4x24xf32>
    %151 = arith.subf %145, %150 : vector<4x24xf32>
    %cst_35 = arith.constant 0.000000e+00 : f32
    %152 = vector.broadcast %cst_35 : f32 to vector<4x96xf32>
    %153 = tpu.concatenate %151, %82, %152 in 1 : vector<4x24xf32>, vector<4x8xf32>, vector<4x96xf32> -> vector<4x128xf32>
    %c0_36 = arith.constant 0 : index
    %c0_37 = arith.constant 0 : index
    %154 = vector.load %arg7[%c0_36, %c0_37] : memref<4x128xf32, #tpu.memory_space<vmem>>, vector<4x128xf32>
    tpu.vector_store %arg7[%c0_36, %c0_37], %153 {strides = array<i32>} : memref<4x128xf32, #tpu.memory_space<vmem>>, vector<4x128xf32>,
    %155 = tpu.concatenate %33, %56, %31, %54 in 1 : vector<4x32xf32>, vector<4x32xf32>, vector<4x32xf32>, vector<4x32xf32> -> vector<4x128xf32>
    %c0_38 = arith.constant 0 : index
    %c0_39 = arith.constant 0 : index
    %156 = vector.load %arg8[%c0_38, %c0_39] : memref<4x128xf32, #tpu.memory_space<vmem>>, vector<4x128xf32>
    tpu.vector_store %arg8[%c0_38, %c0_39], %155 {strides = array<i32>} : memref<4x128xf32, #tpu.memory_space<vmem>>, vector<4x128xf32>,
    return
  }
}

</mosaic_0001>

<llo_original>
// kernel: decoder_attention_forward.1
$region0: #{decoder_attention_forward.1}
  #allocation0 [shape = 'u32[]', space=smem, size = 0x4, offset = 0x4, fixed_abs, tag = 'smem constant byte address 0x4 - core index']
  #allocation1 [shape = 'u32[144,128]{1,0:T(1,128)}', space=vmem, size = 0x12000, scoped, tag = 'internal scratch']
  %s0 = inlined_call_operand.vmem [shape: s32[4,1], index: 0, kind: input, shape index: {}]
  %s1 = inlined_call_operand.vmem [shape: bf16[24,16], index: 1, kind: input, shape index: {}]
  %s2 = inlined_call_operand.vmem [shape: f32[4,256], index: 2, kind: input, shape index: {}]
  %s3 = inlined_call_operand.vmem [shape: f32[4,128], index: 3, kind: input, shape index: {}, may-alias: {3,8}]
  %s4 = inlined_call_operand.vmem [shape: bf16[160,128], index: 4, kind: input, shape index: {}]
  %s5 = inlined_call_operand.vmem [shape: bf16[65,32], index: 5, kind: input, shape index: {}]
  %s6 = inlined_call_operand.vmem [shape: bf16[33,24], index: 6, kind: input, shape index: {}]
  %s7 = inlined_call_operand.vmem [shape: f32[4,128], index: 7, kind: output, shape index: {0}]
  %s8 = inlined_call_operand.vmem [shape: f32[4,128], index: 8, kind: output, shape index: {1}, may-alias: {3,8}]
  %9 = xla_tuple %s7, %s8
  %s10 = sld [smem:[#allocation0]]
  $region46: #{decoder_attention_forward.1} parent=0
    _
  %s12 = ssub.s32 1, %s10
  %s13 = scalar_select 0, %s12, %s10
  // Predicated region
  $region2: #{decoder_attention_forward.1} parent=0 // pred_check
    _
  $region3: #{decoder_attention_forward.1} parent=0 // pred_check_branch
    %15 = sbr.rel (0) target = $region5
  $region4: #{decoder_attention_forward.1} parent=0 // pred_region
    _
  $region5: #{decoder_attention_forward.1} parent=0 // pred_fallthru
    _
  // Predicated region
  $region6: #{decoder_attention_forward.1} parent=0 // pred_check
    _
  $region7: #{decoder_attention_forward.1} parent=0 // pred_check_branch
    %17 = sbr.rel (0) target = $region9
  $region8: #{decoder_attention_forward.1} parent=0 // pred_region
    _
  $region9: #{decoder_attention_forward.1} parent=0 // pred_fallthru
    _
  // Predicated region
  $region10: #{decoder_attention_forward.1} parent=0 // pred_check
    _
  $region11: #{decoder_attention_forward.1} parent=0 // pred_check_branch
    %19 = sbr.rel (0) target = $region13
  $region12: #{decoder_attention_forward.1} parent=0 // pred_region
    _
  $region13: #{decoder_attention_forward.1} parent=0 // pred_fallthru
    _
  // Predicated region
  $region14: #{decoder_attention_forward.1} parent=0 // pred_check
    _
  $region15: #{decoder_attention_forward.1} parent=0 // pred_check_branch
    %21 = sbr.rel (0) target = $region17
  $region16: #{decoder_attention_forward.1} parent=0 // pred_region
    _
  $region17: #{decoder_attention_forward.1} parent=0 // pred_fallthru
    _
  // Predicated region
  $region18: #{decoder_attention_forward.1} parent=0 // pred_check
    _
  $region19: #{decoder_attention_forward.1} parent=0 // pred_check_branch
    %23 = sbr.rel (0) target = $region21
  $region20: #{decoder_attention_forward.1} parent=0 // pred_region
    _
  $region21: #{decoder_attention_forward.1} parent=0 // pred_fallthru
    _
  // Predicated region
  $region22: #{decoder_attention_forward.1} parent=0 // pred_check
    _
  $region23: #{decoder_attention_forward.1} parent=0 // pred_check_branch
    %25 = sbr.rel (0) target = $region25
  $region24: #{decoder_attention_forward.1} parent=0 // pred_region
    _
  $region25: #{decoder_attention_forward.1} parent=0 // pred_fallthru
    _
  // Predicated region
  $region26: #{decoder_attention_forward.1} parent=0 // pred_check
    _
  $region27: #{decoder_attention_forward.1} parent=0 // pred_check_branch
    %27 = sbr.rel (0) target = $region29
  $region28: #{decoder_attention_forward.1} parent=0 // pred_region
    _
  $region29: #{decoder_attention_forward.1} parent=0 // pred_fallthru
    _
  %v30 = vlaneseq
  %v31 = vand.u32 %v30, 127
  %v32 = vld [vmem:[%s0] sm:$0xf]
  %33 = vset.pattern.permute.xlu0 0
  %34 = vperm.xlu0 %33, %v32
  %v35 = vpop.permute.xlu0 %34
  %vm36 = vcmp.eq.s32.totalorder %v31, %v35
  %v37 = vsel %vm36, 1, 0
  %v38 = vcvt.s32.f32 %v37
  %v39 = vpack.c.bf16 %v38, %v38
  %v40 = vld [vmem:[%s1] sm:$0xf]
  %v41 = vld [vmem:[%s1 + $0x4] sm:$0xf]
  %v42 = vld [vmem:[%s1 + $0x8] sm:$0xf]
  %v46 = vunpack.c.l.b16 %v40
  %v47 = vunpack.c.l.b16 %v41
  %v48 = vunpack.c.l.b16 %v42
  %v49 = vpack.c.b16 %v47, %v46
  %v50 = vpack.c.b16 %v48, %v48
  %vm52 = vcmask 195584
  %v54 = vsel %vm52, %v39, 0
  %vm56 = vcmask 1043456
  %v58 = vsel %vm56, %v50, 0
  %60 = vmatprep.subr.bf16.mxu0 0
  %61 = vmatpush1.bf16.msra.mxu0 %v49
  %62 = vmatprep.subr.bf16.mxu0 0
  %63 = vmatpush1.bf16.msra.mxu0 %v58
  %64 = vmatprep.subr.bf16.mxu0 0
  %65 = vmatpush1.bf16.msra.mxu0 0
  %66 = vmatprep.subr.bf16.mxu0 0
  %67 = vmatpush1.bf16.msra.mxu0 0
  %68 = vmatprep.subr.bf16.mxu0 0
  %69 = vmatpush1.bf16.msra.mxu0 0
  %70 = vmatprep.subr.bf16.mxu0 0
  %71 = vmatpush1.bf16.msra.mxu0 0
  %72 = vmatprep.subr.bf16.mxu0 0
  %73 = vmatpush1.bf16.msra.mxu0 0
  %74 = vmatprep.subr.bf16.mxu0 0
  %75 = vmatpush1.bf16.msra.mxu0 0
  %76 = vmatprep.subr.bf16.mxu0 0
  %77 = vmatpush1.bf16.msra.mxu0 0
  %78 = vmatprep.subr.bf16.mxu0 0
  %79 = vmatpush1.bf16.msra.mxu0 0
  %80 = vmatprep.subr.bf16.mxu0 0
  %81 = vmatpush1.bf16.msra.mxu0 0
  %82 = vmatprep.subr.bf16.mxu0 0
  %83 = vmatpush1.bf16.msra.mxu0 0
  %84 = vmatprep.subr.bf16.mxu0 0
  %85 = vmatpush1.bf16.msra.mxu0 0
  %86 = vmatprep.subr.bf16.mxu0 0
  %87 = vmatpush1.bf16.msra.mxu0 0
  %88 = vmatprep.subr.bf16.mxu0 0
  %89 = vmatpush1.bf16.msra.mxu0 0
  %90 = vmatprep.subr.bf16.mxu0 0
  %91 = vmatpush1.bf16.msra.mxu0 0
  %92 = vmatprep.mubr.bf16.mxu0 0
  %93 = vmatmul.mubr.bf16.gmra.mrb[0].mxu0 %v54
  %v94 = vpop.f32.mrb[0].mxu0
  %v95 = vadd.f32 0.0, %v94
  %v96 = vpop.f32.mrb[0].mxu0
  %v97 = vpop.f32.mrb[0].mxu0
  %v98 = vpop.f32.mrb[0].mxu0
  %99 = vdwg.mxu0
  %v100 = vld [vmem:[%s3] sm:$0xf]
  %v101 = vld [vmem:[%s4] sm:$0xf]
  %v102 = vld [vmem:[%s4 + $0x4] sm:$0xf]
  %v103 = vld [vmem:[%s4 + $0x8] sm:$0xf]
  %v104 = vld [vmem:[%s4 + $0xc] sm:$0xf]
  %v105 = vld [vmem:[%s4 + $0x10] sm:$0xf]
  %v106 = vld [vmem:[%s4 + $0x14] sm:$0xf]
  %v107 = vld [vmem:[%s4 + $0x18] sm:$0xf]
  %v108 = vld [vmem:[%s4 + $0x1c] sm:$0xf]
  %v109 = vld [vmem:[%s4 + $0x20] sm:$0xf]
  %v110 = vld [vmem:[%s4 + $0x24] sm:$0xf]
  %v111 = vpack.c.bf16 %v95, %v95
  %v112 = vpack.c.bf16 %v100, %v100
  %114 = vrot.lane.b32.xlu0 %v112, 16
  %v115 = vpop.permute.xlu0 %114
  %vm116 = vcmask 130048
  %v119 = vsel %vm116, %v111, %v115
  %vm120 = vcmask 392192
  %v122 = vsel %vm120, %v119, 1065369472
  %vm123 = vcmask 400384
  %v125 = vsel %vm123, %v122, 0
  %v136 = vunpack.c.l.b16 %v101
  %v137 = vunpack.c.l.b16 %v102
  %v138 = vunpack.c.l.b16 %v103
  %v139 = vunpack.c.l.b16 %v104
  %v140 = vunpack.c.l.b16 %v105
  %v141 = vunpack.c.l.b16 %v106
  %v142 = vunpack.c.l.b16 %v107
  %v143 = vunpack.c.l.b16 %v108
  %v144 = vunpack.c.l.b16 %v109
  %v145 = vunpack.c.l.b16 %v110
  %v146 = vpack.c.b16 %v137, %v136
  %v147 = vpack.c.b16 %v139, %v138
  %v148 = vpack.c.b16 %v141, %v140
  %v149 = vpack.c.b16 %v143, %v142
  %v150 = vpack.c.b16 %v145, %v144
  %vm156 = vcmask 654336
  %v157 = vsel %vm156, %v125, 0
  %159 = vmatprep.subr.bf16.mxu0 0
  %160 = vmatpush1.bf16.msra.mxu0 %v146
  %161 = vmatprep.subr.bf16.mxu0 0
  %162 = vmatpush1.bf16.msra.mxu0 %v147
  %163 = vmatprep.subr.bf16.mxu0 0
  %164 = vmatpush1.bf16.msra.mxu0 %v148
  %165 = vmatprep.subr.bf16.mxu0 0
  %166 = vmatpush1.bf16.msra.mxu0 %v149
  %167 = vmatprep.subr.bf16.mxu0 0
  %168 = vmatpush1.bf16.msra.mxu0 %v150
  %169 = vmatprep.subr.bf16.mxu0 0
  %170 = vmatpush1.bf16.msra.mxu0 0
  %171 = vmatprep.subr.bf16.mxu0 0
  %172 = vmatpush1.bf16.msra.mxu0 0
  %173 = vmatprep.subr.bf16.mxu0 0
  %174 = vmatpush1.bf16.msra.mxu0 0
  %175 = vmatprep.subr.bf16.mxu0 0
  %176 = vmatpush1.bf16.msra.mxu0 0
  %177 = vmatprep.subr.bf16.mxu0 0
  %178 = vmatpush1.bf16.msra.mxu0 0
  %179 = vmatprep.subr.bf16.mxu0 0
  %180 = vmatpush1.bf16.msra.mxu0 0
  %181 = vmatprep.subr.bf16.mxu0 0
  %182 = vmatpush1.bf16.msra.mxu0 0
  %183 = vmatprep.subr.bf16.mxu0 0
  %184 = vmatpush1.bf16.msra.mxu0 0
  %185 = vmatprep.subr.bf16.mxu0 0
  %186 = vmatpush1.bf16.msra.mxu0 0
  %187 = vmatprep.subr.bf16.mxu0 0
  %188 = vmatpush1.bf16.msra.mxu0 0
  %189 = vmatprep.subr.bf16.mxu0 0
  %190 = vmatpush1.bf16.msra.mxu0 0
  %191 = vmatprep.mubr.bf16.mxu0 0
  %192 = vmatmul.mubr.bf16.gmra.mrb[0].mxu0 %v157
  %v193 = vpop.f32.mrb[0].mxu0
  %v194 = vadd.f32 0.0, %v193
  %v195 = vpop.f32.mrb[0].mxu0
  %v196 = vpop.f32.mrb[0].mxu0
  %v197 = vpop.f32.mrb[0].mxu0
  %198 = vdwg.mxu0
  %v199 = vxor.u32 %v194, 2147483648
  %v200 = vmul.f32 %v199, 1.442695
  %v201 = vpow.pop %v200
  %v202 = vadd.f32 %v201, 1.0
  %v203 = vrcp.pop %v202
  %v204 = vmul.f32 1.0, %v203
  %v205 = vtanh.pop %v194
  %207 = vrot.lane.b32.xlu0 %v100, 96
  %v208 = vpop.permute.xlu0 %207
  %v210 = vmul.f32 %v204, %v208
  %212 = vrot.lane.b32.xlu0 %v205, 64
  %v213 = vpop.permute.xlu0 %212
  %v215 = vmul.f32 %v204, %v213
  %217 = vrot.lane.b32.xlu0 %v215, 32
  %v218 = vpop.permute.xlu0 %217
  %v220 = vadd.f32 %v210, %v218
  %v221 = vtanh.pop %v220
  %223 = vrot.lane.b32.xlu0 %v221, 64
  %v224 = vpop.permute.xlu0 %223
  %v226 = vmul.f32 %v204, %v224
  %v227 = vld [vmem:[%s4 + $0x28] sm:$0xf]
  %v228 = vld [vmem:[%s4 + $0x2c] sm:$0xf]
  %v229 = vld [vmem:[%s4 + $0x30] sm:$0xf]
  %v230 = vld [vmem:[%s4 + $0x34] sm:$0xf]
  %v231 = vld [vmem:[%s4 + $0x38] sm:$0xf]
  %v232 = vld [vmem:[%s4 + $0x3c] sm:$0xf]
  %v233 = vld [vmem:[%s4 + $0x40] sm:$0xf]
  %v234 = vld [vmem:[%s4 + $0x44] sm:$0xf]
  %v235 = vld [vmem:[%s4 + $0x48] sm:$0xf]
  %v236 = vld [vmem:[%s4 + $0x4c] sm:$0xf]
  %v237 = vpack.c.bf16 %v226, %v226
  %239 = vrot.lane.b32.xlu0 %v237, 32
  %v240 = vpop.permute.xlu0 %239
  %vm241 = vcmask 261120
  %v244 = vsel %vm241, %v240, %v112
  %vm245 = vcmask 523264
  %v246 = vsel %vm245, %v244, 1065369472
  %vm247 = vcmask 531456
  %v248 = vsel %vm247, %v246, 0
  %v259 = vunpack.c.l.b16 %v227
  %v260 = vunpack.c.l.b16 %v228
  %v261 = vunpack.c.l.b16 %v229
  %v262 = vunpack.c.l.b16 %v230
  %v263 = vunpack.c.l.b16 %v231
  %v264 = vunpack.c.l.b16 %v232
  %v265 = vunpack.c.l.b16 %v233
  %v266 = vunpack.c.l.b16 %v234
  %v267 = vunpack.c.l.b16 %v235
  %v268 = vunpack.c.l.b16 %v236
  %v269 = vpack.c.b16 %v260, %v259
  %v270 = vpack.c.b16 %v262, %v261
  %v271 = vpack.c.b16 %v264, %v263
  %v272 = vpack.c.b16 %v266, %v265
  %v273 = vpack.c.b16 %v268, %v267
  %v279 = vsel %vm156, %v248, 0
  %281 = vmatprep.subr.bf16.mxu0 0
  %282 = vmatpush1.bf16.msra.mxu0 %v269
  %283 = vmatprep.subr.bf16.mxu0 0
  %284 = vmatpush1.bf16.msra.mxu0 %v270
  %285 = vmatprep.subr.bf16.mxu0 0
  %286 = vmatpush1.bf16.msra.mxu0 %v271
  %287 = vmatprep.subr.bf16.mxu0 0
  %288 = vmatpush1.bf16.msra.mxu0 %v272
  %289 = vmatprep.subr.bf16.mxu0 0
  %290 = vmatpush1.bf16.msra.mxu0 %v273
  %291 = vmatprep.subr.bf16.mxu0 0
  %292 = vmatpush1.bf16.msra.mxu0 0
  %293 = vmatprep.subr.bf16.mxu0 0
  %294 = vmatpush1.bf16.msra.mxu0 0
  %295 = vmatprep.subr.bf16.mxu0 0
  %296 = vmatpush1.bf16.msra.mxu0 0
  %297 = vmatprep.subr.bf16.mxu0 0
  %298 = vmatpush1.bf16.msra.mxu0 0
  %299 = vmatprep.subr.bf16.mxu0 0
  %300 = vmatpush1.bf16.msra.mxu0 0
  %301 = vmatprep.subr.bf16.mxu0 0
  %302 = vmatpush1.bf16.msra.mxu0 0
  %303 = vmatprep.subr.bf16.mxu0 0
  %304 = vmatpush1.bf16.msra.mxu0 0
  %305 = vmatprep.subr.bf16.mxu0 0
  %306 = vmatpush1.bf16.msra.mxu0 0
  %307 = vmatprep.subr.bf16.mxu0 0
  %308 = vmatpush1.bf16.msra.mxu0 0
  %309 = vmatprep.subr.bf16.mxu0 0
  %310 = vmatpush1.bf16.msra.mxu0 0
  %311 = vmatprep.subr.bf16.mxu0 0
  %312 = vmatpush1.bf16.msra.mxu0 0
  %313 = vmatprep.mubr.bf16.mxu0 0
  %314 = vmatmul.mubr.bf16.gmra.mrb[0].mxu0 %v279
  %v315 = vpop.f32.mrb[0].mxu0
  %v316 = vadd.f32 0.0, %v315
  %v317 = vpop.f32.mrb[0].mxu0
  %v318 = vpop.f32.mrb[0].mxu0
  %v319 = vpop.f32.mrb[0].mxu0
  %320 = vdwg.mxu0
  %v321 = vxor.u32 %v316, 2147483648
  %v322 = vmul.f32 %v321, 1.442695
  %v323 = vpow.pop %v322
  %v324 = vadd.f32 %v323, 1.0
  %v325 = vrcp.pop %v324
  %v326 = vmul.f32 1.0, %v325
  %v327 = vtanh.pop %v316
  %328 = vrot.lane.b32.xlu0 %v100, 64
  %v329 = vpop.permute.xlu0 %328
  %v331 = vmul.f32 %v326, %v329
  %333 = vrot.lane.b32.xlu0 %v327, 64
  %v334 = vpop.permute.xlu0 %333
  %v336 = vmul.f32 %v326, %v334
  %338 = vrot.lane.b32.xlu0 %v336, 32
  %v339 = vpop.permute.xlu0 %338
  %v341 = vadd.f32 %v331, %v339
  %v342 = vtanh.pop %v341
  %344 = vrot.lane.b32.xlu0 %v342, 64
  %v345 = vpop.permute.xlu0 %344
  %v347 = vmul.f32 %v326, %v345
  %v348 = vld [vmem:[%s2] sm:$0xff]
  %350 = vrot.lane.b32.xlu0 %v347, 32
  %v351 = vpop.permute.xlu0 %350
  %353 = vrot.lane.b32.xlu0 %v347, 64
  %v354 = vpop.permute.xlu0 %353
  %356 = vrot.lane.b32.xlu0 %v347, 96
  %v357 = vpop.permute.xlu0 %356
  %v359 = vsel %vm241, %v351, %v354
  %v360 = vsel %vm245, %v359, %v357
  %vm361 = vcmask 785408
  %v362 = vsel %vm361, %v360, %v347
  %v363 = vlaneseq
  %v364 = vshrl.u32 %v363, 7
  %v365 = vadd.s32 %v364, 8
  %v366 = vadd.s32 %v364, 16
  %v367 = vadd.s32 %v364, 24
  %v368 = vadd.s32 %v364, 32
  %v369 = vadd.s32 %v364, 40
  %v370 = vadd.s32 %v364, 48
  %v371 = vadd.s32 %v364, 56
  %v372 = vadd.s32 %v364, 64
  %v373 = vadd.s32 %v364, 72
  %v374 = vadd.s32 %v364, 80
  %v375 = vadd.s32 %v364, 88
  %v376 = vadd.s32 %v364, 96
  %v377 = vadd.s32 %v364, 104
  %v378 = vadd.s32 %v364, 112
  %v379 = vadd.s32 %v364, 120
  %v380 = vadd.s32 %v364, 128
  %v381 = vadd.s32 %v364, 136
  %v382 = vadd.s32 %v364, 144
  %v383 = vadd.s32 %v364, 152
  %v384 = vadd.s32 %v364, 160
  %v385 = vadd.s32 %v364, 168
  %v386 = vadd.s32 %v364, 176
  %v387 = vadd.s32 %v364, 184
  %v388 = vadd.s32 %v364, 192
  %v389 = vadd.s32 %v364, 200
  %v390 = vadd.s32 %v364, 208
  %v391 = vadd.s32 %v364, 216
  %v392 = vadd.s32 %v364, 224
  %v393 = vadd.s32 %v364, 232
  %v394 = vadd.s32 %v364, 240
  %v395 = vadd.s32 %v364, 248
  %v396 = vmul.u32 %v31, 32
  %vm397 = vcmp.ge.s32.totalorder %v364, %v396
  %vm398 = vcmp.ge.s32.totalorder %v365, %v396
  %vm399 = vcmp.ge.s32.totalorder %v366, %v396
  %vm400 = vcmp.ge.s32.totalorder %v367, %v396
  %vm401 = vcmp.ge.s32.totalorder %v368, %v396
  %vm402 = vcmp.ge.s32.totalorder %v369, %v396
  %vm403 = vcmp.ge.s32.totalorder %v370, %v396
  %vm404 = vcmp.ge.s32.totalorder %v371, %v396
  %vm405 = vcmp.ge.s32.totalorder %v372, %v396
  %vm406 = vcmp.ge.s32.totalorder %v373, %v396
  %vm407 = vcmp.ge.s32.totalorder %v374, %v396
  %vm408 = vcmp.ge.s32.totalorder %v375, %v396
  %vm409 = vcmp.ge.s32.totalorder %v376, %v396
  %vm410 = vcmp.ge.s32.totalorder %v377, %v396
  %vm411 = vcmp.ge.s32.totalorder %v378, %v396
  %vm412 = vcmp.ge.s32.totalorder %v379, %v396
  %vm413 = vcmp.ge.s32.totalorder %v380, %v396
  %vm414 = vcmp.ge.s32.totalorder %v381, %v396
  %vm415 = vcmp.ge.s32.totalorder %v382, %v396
  %vm416 = vcmp.ge.s32.totalorder %v383, %v396
  %vm417 = vcmp.ge.s32.totalorder %v384, %v396
  %vm418 = vcmp.ge.s32.totalorder %v385, %v396
  %vm419 = vcmp.ge.s32.totalorder %v386, %v396
  %vm420 = vcmp.ge.s32.totalorder %v387, %v396
  %vm421 = vcmp.ge.s32.totalorder %v388, %v396
  %vm422 = vcmp.ge.s32.totalorder %v389, %v396
  %vm423 = vcmp.ge.s32.totalorder %v390, %v396
  %vm424 = vcmp.ge.s32.totalorder %v391, %v396
  %vm425 = vcmp.ge.s32.totalorder %v392, %v396
  %vm426 = vcmp.ge.s32.totalorder %v393, %v396
  %vm427 = vcmp.ge.s32.totalorder %v394, %v396
  %vm428 = vcmp.ge.s32.totalorder %v395, %v396
  %v429 = vadd.s32 %v31, 1
  %v430 = vmul.u32 %v429, 32
  %vm431 = vcmp.lt.s32.totalorder %v364, %v430
  %vm432 = vcmp.lt.s32.totalorder %v365, %v430
  %vm433 = vcmp.lt.s32.totalorder %v366, %v430
  %vm434 = vcmp.lt.s32.totalorder %v367, %v430
  %vm435 = vcmp.lt.s32.totalorder %v368, %v430
  %vm436 = vcmp.lt.s32.totalorder %v369, %v430
  %vm437 = vcmp.lt.s32.totalorder %v370, %v430
  %vm438 = vcmp.lt.s32.totalorder %v371, %v430
  %vm439 = vcmp.lt.s32.totalorder %v372, %v430
  %vm440 = vcmp.lt.s32.totalorder %v373, %v430
  %vm441 = vcmp.lt.s32.totalorder %v374, %v430
  %vm442 = vcmp.lt.s32.totalorder %v375, %v430
  %vm443 = vcmp.lt.s32.totalorder %v376, %v430
  %vm444 = vcmp.lt.s32.totalorder %v377, %v430
  %vm445 = vcmp.lt.s32.totalorder %v378, %v430
  %vm446 = vcmp.lt.s32.totalorder %v379, %v430
  %vm447 = vcmp.lt.s32.totalorder %v380, %v430
  %vm448 = vcmp.lt.s32.totalorder %v381, %v430
  %vm449 = vcmp.lt.s32.totalorder %v382, %v430
  %vm450 = vcmp.lt.s32.totalorder %v383, %v430
  %vm451 = vcmp.lt.s32.totalorder %v384, %v430
  %vm452 = vcmp.lt.s32.totalorder %v385, %v430
  %vm453 = vcmp.lt.s32.totalorder %v386, %v430
  %vm454 = vcmp.lt.s32.totalorder %v387, %v430
  %vm455 = vcmp.lt.s32.totalorder %v388, %v430
  %vm456 = vcmp.lt.s32.totalorder %v389, %v430
  %vm457 = vcmp.lt.s32.totalorder %v390, %v430
  %vm458 = vcmp.lt.s32.totalorder %v391, %v430
  %vm459 = vcmp.lt.s32.totalorder %v392, %v430
  %vm460 = vcmp.lt.s32.totalorder %v393, %v430
  %vm461 = vcmp.lt.s32.totalorder %v394, %v430
  %vm462 = vcmp.lt.s32.totalorder %v395, %v430
  %vm463 = vmand %vm397, %vm431
  %vm464 = vmand %vm398, %vm432
  %vm465 = vmand %vm399, %vm433
  %vm466 = vmand %vm400, %vm434
  %vm467 = vmand %vm401, %vm435
  %vm468 = vmand %vm402, %vm436
  %vm469 = vmand %vm403, %vm437
  %vm470 = vmand %vm404, %vm438
  %vm471 = vmand %vm405, %vm439
  %vm472 = vmand %vm406, %vm440
  %vm473 = vmand %vm407, %vm441
  %vm474 = vmand %vm408, %vm442
  %vm475 = vmand %vm409, %vm443
  %vm476 = vmand %vm410, %vm444
  %vm477 = vmand %vm411, %vm445
  %vm478 = vmand %vm412, %vm446
  %vm479 = vmand %vm413, %vm447
  %vm480 = vmand %vm414, %vm448
  %vm481 = vmand %vm415, %vm449
  %vm482 = vmand %vm416, %vm450
  %vm483 = vmand %vm417, %vm451
  %vm484 = vmand %vm418, %vm452
  %vm485 = vmand %vm419, %vm453
  %vm486 = vmand %vm420, %vm454
  %vm487 = vmand %vm421, %vm455
  %vm488 = vmand %vm422, %vm456
  %vm489 = vmand %vm423, %vm457
  %vm490 = vmand %vm424, %vm458
  %vm491 = vmand %vm425, %vm459
  %vm492 = vmand %vm426, %vm460
  %vm493 = vmand %vm427, %vm461
  %vm494 = vmand %vm428, %vm462
  %v495 = vsel %vm463, 1, 0
  %v496 = vsel %vm464, 1, 0
  %v497 = vsel %vm465, 1, 0
  %v498 = vsel %vm466, 1, 0
  %v499 = vsel %vm467, 1, 0
  %v500 = vsel %vm468, 1, 0
  %v501 = vsel %vm469, 1, 0
  %v502 = vsel %vm470, 1, 0
  %v503 = vsel %vm471, 1, 0
  %v504 = vsel %vm472, 1, 0
  %v505 = vsel %vm473, 1, 0
  %v506 = vsel %vm474, 1, 0
  %v507 = vsel %vm475, 1, 0
  %v508 = vsel %vm476, 1, 0
  %v509 = vsel %vm477, 1, 0
  %v510 = vsel %vm478, 1, 0
  %v511 = vsel %vm479, 1, 0
  %v512 = vsel %vm480, 1, 0
  %v513 = vsel %vm481, 1, 0
  %v514 = vsel %vm482, 1, 0
  %v515 = vsel %vm483, 1, 0
  %v516 = vsel %vm484, 1, 0
  %v517 = vsel %vm485, 1, 0
  %v518 = vsel %vm486, 1, 0
  %v519 = vsel %vm487, 1, 0
  %v520 = vsel %vm488, 1, 0
  %v521 = vsel %vm489, 1, 0
  %v522 = vsel %vm490, 1, 0
  %v523 = vsel %vm491, 1, 0
  %v524 = vsel %vm492, 1, 0
  %v525 = vsel %vm493, 1, 0
  %v526 = vsel %vm494, 1, 0
  %v527 = vcvt.s32.f32 %v495
  %v528 = vcvt.s32.f32 %v496
  %v529 = vcvt.s32.f32 %v497
  %v530 = vcvt.s32.f32 %v498
  %v531 = vcvt.s32.f32 %v499
  %v532 = vcvt.s32.f32 %v500
  %v533 = vcvt.s32.f32 %v501
  %v534 = vcvt.s32.f32 %v502
  %v535 = vcvt.s32.f32 %v503
  %v536 = vcvt.s32.f32 %v504
  %v537 = vcvt.s32.f32 %v505
  %v538 = vcvt.s32.f32 %v506
  %v539 = vcvt.s32.f32 %v507
  %v540 = vcvt.s32.f32 %v508
  %v541 = vcvt.s32.f32 %v509
  %v542 = vcvt.s32.f32 %v510
  %v543 = vcvt.s32.f32 %v511
  %v544 = vcvt.s32.f32 %v512
  %v545 = vcvt.s32.f32 %v513
  %v546 = vcvt.s32.f32 %v514
  %v547 = vcvt.s32.f32 %v515
  %v548 = vcvt.s32.f32 %v516
  %v549 = vcvt.s32.f32 %v517
  %v550 = vcvt.s32.f32 %v518
  %v551 = vcvt.s32.f32 %v519
  %v552 = vcvt.s32.f32 %v520
  %v553 = vcvt.s32.f32 %v521
  %v554 = vcvt.s32.f32 %v522
  %v555 = vcvt.s32.f32 %v523
  %v556 = vcvt.s32.f32 %v524
  %v557 = vcvt.s32.f32 %v525
  %v558 = vcvt.s32.f32 %v526
  %v560 = vcombine.low %v362, %v362
  %v562 = vmul.f32 %v348, %v560
  %v564 = vcombine.high %v562, %v562
  %566 = vmatprep.subr.mxu0 0.0
  %567 = vmatpush1.msra.mxu0 %v527
  %568 = vmatprep.subr.mxu0 0.0
  %569 = vmatpush1.msra.mxu0 %v528
  %570 = vmatprep.subr.mxu0 0.0
  %571 = vmatpush1.msra.mxu0 %v529
  %572 = vmatprep.subr.mxu0 0.0
  %573 = vmatpush1.msra.mxu0 %v530
  %574 = vmatprep.subr.mxu0 0.0
  %575 = vmatpush1.msra.mxu0 %v531
  %576 = vmatprep.subr.mxu0 0.0
  %577 = vmatpush1.msra.mxu0 %v532
  %578 = vmatprep.subr.mxu0 0.0
  %579 = vmatpush1.msra.mxu0 %v533
  %580 = vmatprep.subr.mxu0 0.0
  %581 = vmatpush1.msra.mxu0 %v534
  %582 = vmatprep.subr.mxu0 0.0
  %583 = vmatpush1.msra.mxu0 %v535
  %584 = vmatprep.subr.mxu0 0.0
  %585 = vmatpush1.msra.mxu0 %v536
  %586 = vmatprep.subr.mxu0 0.0
  %587 = vmatpush1.msra.mxu0 %v537
  %588 = vmatprep.subr.mxu0 0.0
  %589 = vmatpush1.msra.mxu0 %v538
  %590 = vmatprep.subr.mxu0 0.0
  %591 = vmatpush1.msra.mxu0 %v539
  %592 = vmatprep.subr.mxu0 0.0
  %593 = vmatpush1.msra.mxu0 %v540
  %594 = vmatprep.subr.mxu0 0.0
  %595 = vmatpush1.msra.mxu0 %v541
  %596 = vmatprep.subr.mxu0 0.0
  %597 = vmatpush1.msra.mxu0 %v542
  %598 = vmatprep.subr.mxu0 0.0
  %599 = vmatpush1.msra.mxu0 %v543
  %600 = vmatprep.subr.mxu0 0.0
  %601 = vmatpush1.msra.mxu0 %v544
  %602 = vmatprep.subr.mxu0 0.0
  %603 = vmatpush1.msra.mxu0 %v545
  %604 = vmatprep.subr.mxu0 0.0
  %605 = vmatpush1.msra.mxu0 %v546
  %606 = vmatprep.subr.mxu0 0.0
  %607 = vmatpush1.msra.mxu0 %v547
  %608 = vmatprep.subr.mxu0 0.0
  %609 = vmatpush1.msra.mxu0 %v548
  %610 = vmatprep.subr.mxu0 0.0
  %611 = vmatpush1.msra.mxu0 %v549
  %612 = vmatprep.subr.mxu0 0.0
  %613 = vmatpush1.msra.mxu0 %v550
  %614 = vmatprep.subr.mxu0 0.0
  %615 = vmatpush1.msra.mxu0 %v551
  %616 = vmatprep.subr.mxu0 0.0
  %617 = vmatpush1.msra.mxu0 %v552
  %618 = vmatprep.subr.mxu0 0.0
  %619 = vmatpush1.msra.mxu0 %v553
  %620 = vmatprep.subr.mxu0 0.0
  %621 = vmatpush1.msra.mxu0 %v554
  %622 = vmatprep.subr.mxu0 0.0
  %623 = vmatpush1.msra.mxu0 %v555
  %624 = vmatprep.subr.mxu0 0.0
  %625 = vmatpush1.msra.mxu0 %v556
  %626 = vmatprep.subr.mxu0 0.0
  %627 = vmatpush1.msra.mxu0 %v557
  %628 = vmatprep.subr.mxu0 0.0
  %629 = vmatpush1.msra.mxu0 %v558
  %630 = vmatprep.mubr.f32.mxu0 %v564
  %631 = vmatmul.mubr.f32.gmra.mrb[0].mxu0 %v562
  %v632 = vpop.f32.mrb[0].mxu0
  %v633 = vadd.f32 0.0, %v632
  %v634 = vpop.f32.mrb[0].mxu0
  %635 = vdwg.mxu0
  %vm636 = vcmask 60416
  %v637 = vsel %vm636, %v633, -inf
  %638 = vmax.xlane.f32.xlu0 %v637
  %v639 = vpop.xlane.xlu0 %638
  %v640 = vsub.f32 %v633, %v639
  %v641 = vmul.f32 %v640, 1.442695
  %v642 = vpow.pop %v641
  %v643 = vsel %vm636, %v642, 0.0
  %644 = vadd.xlane.f32.xlu0 %v643
  %v645 = vpop.xlane.xlu0 %644
  %v646 = vrcp.pop %v645
  %v647 = vmul.f32 %v642, %v646
  %v648 = vadd.s32 %v31, 128
  %v649 = vmul.u32 %v364, 32
  %vm650 = vcmp.ge.s32.totalorder %v31, %v649
  %vm651 = vcmp.ge.s32.totalorder %v648, %v649
  %v652 = vadd.s32 %v364, 1
  %v653 = vmul.u32 %v652, 32
  %vm654 = vcmp.lt.s32.totalorder %v31, %v653
  %vm655 = vcmp.lt.s32.totalorder %v648, %v653
  %vm656 = vmand %vm650, %vm654
  %vm657 = vmand %vm651, %vm655
  %v658 = vsel %vm656, 1, 0
  %v659 = vsel %vm657, 1, 0
  %v660 = vcvt.s32.f32 %v658
  %v661 = vcvt.s32.f32 %v659
  %vm662 = vcmask 64512
  %v664 = vsel %vm662, %v647, 0
  %666 = vmatprep.subr.mxu0 %v661
  %667 = vmatpush1.msra.mxu0 %v660
  %668 = vmatprep.subr.mxu0 0.0
  %669 = vmatpush1.msra.mxu0 0.0
  %670 = vmatprep.subr.mxu0 0.0
  %671 = vmatpush1.msra.mxu0 0.0
  %672 = vmatprep.subr.mxu0 0.0
  %673 = vmatpush1.msra.mxu0 0.0
  %674 = vmatprep.subr.mxu0 0.0
  %675 = vmatpush1.msra.mxu0 0.0
  %676 = vmatprep.subr.mxu0 0.0
  %677 = vmatpush1.msra.mxu0 0.0
  %678 = vmatprep.subr.mxu0 0.0
  %679 = vmatpush1.msra.mxu0 0.0
  %680 = vmatprep.subr.mxu0 0.0
  %681 = vmatpush1.msra.mxu0 0.0
  %682 = vmatprep.subr.mxu0 0.0
  %683 = vmatpush1.msra.mxu0 0.0
  %684 = vmatprep.subr.mxu0 0.0
  %685 = vmatpush1.msra.mxu0 0.0
  %686 = vmatprep.subr.mxu0 0.0
  %687 = vmatpush1.msra.mxu0 0.0
  %688 = vmatprep.subr.mxu0 0.0
  %689 = vmatpush1.msra.mxu0 0.0
  %690 = vmatprep.subr.mxu0 0.0
  %691 = vmatpush1.msra.mxu0 0.0
  %692 = vmatprep.subr.mxu0 0.0
  %693 = vmatpush1.msra.mxu0 0.0
  %694 = vmatprep.subr.mxu0 0.0
  %695 = vmatpush1.msra.mxu0 0.0
  %696 = vmatprep.subr.mxu0 0.0
  %697 = vmatpush1.msra.mxu0 0.0
  %698 = vmatprep.subr.mxu0 0.0
  %699 = vmatpush1.msra.mxu0 0.0
  %700 = vmatprep.subr.mxu0 0.0
  %701 = vmatpush1.msra.mxu0 0.0
  %702 = vmatprep.subr.mxu0 0.0
  %703 = vmatpush1.msra.mxu0 0.0
  %704 = vmatprep.subr.mxu0 0.0
  %705 = vmatpush1.msra.mxu0 0.0
  %706 = vmatprep.subr.mxu0 0.0
  %707 = vmatpush1.msra.mxu0 0.0
  %708 = vmatprep.subr.mxu0 0.0
  %709 = vmatpush1.msra.mxu0 0.0
  %710 = vmatprep.subr.mxu0 0.0
  %711 = vmatpush1.msra.mxu0 0.0
  %712 = vmatprep.subr.mxu0 0.0
  %713 = vmatpush1.msra.mxu0 0.0
  %714 = vmatprep.subr.mxu0 0.0
  %715 = vmatpush1.msra.mxu0 0.0
  %716 = vmatprep.subr.mxu0 0.0
  %717 = vmatpush1.msra.mxu0 0.0
  %718 = vmatprep.subr.mxu0 0.0
  %719 = vmatpush1.msra.mxu0 0.0
  %720 = vmatprep.subr.mxu0 0.0
  %721 = vmatpush1.msra.mxu0 0.0
  %722 = vmatprep.subr.mxu0 0.0
  %723 = vmatpush1.msra.mxu0 0.0
  %724 = vmatprep.subr.mxu0 0.0
  %725 = vmatpush1.msra.mxu0 0.0
  %726 = vmatprep.subr.mxu0 0.0
  %727 = vmatpush1.msra.mxu0 0.0
  %728 = vmatprep.subr.mxu0 0.0
  %729 = vmatpush1.msra.mxu0 0.0
  %730 = vmatprep.mubr.f32.mxu0 0.0
  %731 = vmatmul.mubr.f32.gmra.mrb[0].mxu0 %v664
  %v732 = vpop.f32.mrb[0].mxu0
  %v733 = vadd.f32 0.0, %v732
  %v734 = vpop.f32.mrb[0].mxu0
  %v735 = vadd.f32 0.0, %v734
  %736 = vdwg.mxu0
  %vm737 = vcmp.eq.s32.totalorder %v364, %v31
  %vm738 = vcmp.eq.s32.totalorder %v365, %v31
  %vm739 = vcmp.eq.s32.totalorder %v366, %v31
  %vm740 = vcmp.eq.s32.totalorder %v367, %v31
  %vm741 = vcmp.eq.s32.totalorder %v368, %v31
  %vm742 = vcmp.eq.s32.totalorder %v369, %v31
  %vm743 = vcmp.eq.s32.totalorder %v370, %v31
  %vm744 = vcmp.eq.s32.totalorder %v371, %v31
  %vm745 = vcmp.eq.s32.totalorder %v372, %v31
  %vm746 = vcmp.eq.s32.totalorder %v373, %v31
  %vm747 = vcmp.eq.s32.totalorder %v374, %v31
  %vm748 = vcmp.eq.s32.totalorder %v375, %v31
  %vm749 = vcmp.eq.s32.totalorder %v376, %v31
  %vm750 = vcmp.eq.s32.totalorder %v377, %v31
  %vm751 = vcmp.eq.s32.totalorder %v378, %v31
  %vm752 = vcmp.eq.s32.totalorder %v379, %v31
  %vm753 = vcmp.eq.s32.totalorder %v380, %v31
  %vm754 = vcmp.eq.s32.totalorder %v381, %v31
  %vm755 = vcmp.eq.s32.totalorder %v382, %v31
  %vm756 = vcmp.eq.s32.totalorder %v383, %v31
  %vm757 = vcmp.eq.s32.totalorder %v384, %v31
  %vm758 = vcmp.eq.s32.totalorder %v385, %v31
  %vm759 = vcmp.eq.s32.totalorder %v386, %v31
  %vm760 = vcmp.eq.s32.totalorder %v387, %v31
  %vm761 = vcmp.eq.s32.totalorder %v388, %v31
  %vm762 = vcmp.eq.s32.totalorder %v389, %v31
  %vm763 = vcmp.eq.s32.totalorder %v390, %v31
  %vm764 = vcmp.eq.s32.totalorder %v391, %v31
  %vm765 = vcmp.eq.s32.totalorder %v392, %v31
  %vm766 = vcmp.eq.s32.totalorder %v393, %v31
  %vm767 = vcmp.eq.s32.totalorder %v394, %v31
  %vm768 = vcmp.eq.s32.totalorder %v395, %v31
  %v769 = vadd.s32 %v31, 32
  %vm770 = vcmp.eq.s32.totalorder %v364, %v769
  %vm771 = vcmp.eq.s32.totalorder %v365, %v769
  %vm772 = vcmp.eq.s32.totalorder %v366, %v769
  %vm773 = vcmp.eq.s32.totalorder %v367, %v769
  %vm774 = vcmp.eq.s32.totalorder %v368, %v769
  %vm775 = vcmp.eq.s32.totalorder %v369, %v769
  %vm776 = vcmp.eq.s32.totalorder %v370, %v769
  %vm777 = vcmp.eq.s32.totalorder %v371, %v769
  %vm778 = vcmp.eq.s32.totalorder %v372, %v769
  %vm779 = vcmp.eq.s32.totalorder %v373, %v769
  %vm780 = vcmp.eq.s32.totalorder %v374, %v769
  %vm781 = vcmp.eq.s32.totalorder %v375, %v769
  %vm782 = vcmp.eq.s32.totalorder %v376, %v769
  %vm783 = vcmp.eq.s32.totalorder %v377, %v769
  %vm784 = vcmp.eq.s32.totalorder %v378, %v769
  %vm785 = vcmp.eq.s32.totalorder %v379, %v769
  %vm786 = vcmp.eq.s32.totalorder %v380, %v769
  %vm787 = vcmp.eq.s32.totalorder %v381, %v769
  %vm788 = vcmp.eq.s32.totalorder %v382, %v769
  %vm789 = vcmp.eq.s32.totalorder %v383, %v769
  %vm790 = vcmp.eq.s32.totalorder %v384, %v769
  %vm791 = vcmp.eq.s32.totalorder %v385, %v769
  %vm792 = vcmp.eq.s32.totalorder %v386, %v769
  %vm793 = vcmp.eq.s32.totalorder %v387, %v769
  %vm794 = vcmp.eq.s32.totalorder %v388, %v769
  %vm795 = vcmp.eq.s32.totalorder %v389, %v769
  %vm796 = vcmp.eq.s32.totalorder %v390, %v769
  %vm797 = vcmp.eq.s32.totalorder %v391, %v769
  %vm798 = vcmp.eq.s32.totalorder %v392, %v769
  %vm799 = vcmp.eq.s32.totalorder %v393, %v769
  %vm800 = vcmp.eq.s32.totalorder %v394, %v769
  %vm801 = vcmp.eq.s32.totalorder %v395, %v769
  %vm802 = vmor %vm737, %vm770
  %vm803 = vmor %vm738, %vm771
  %vm804 = vmor %vm739, %vm772
  %vm805 = vmor %vm740, %vm773
  %vm806 = vmor %vm741, %vm774
  %vm807 = vmor %vm742, %vm775
  %vm808 = vmor %vm743, %vm776
  %vm809 = vmor %vm744, %vm777
  %vm810 = vmor %vm745, %vm778
  %vm811 = vmor %vm746, %vm779
  %vm812 = vmor %vm747, %vm780
  %vm813 = vmor %vm748, %vm781
  %vm814 = vmor %vm749, %vm782
  %vm815 = vmor %vm750, %vm783
  %vm816 = vmor %vm751, %vm784
  %vm817 = vmor %vm752, %vm785
  %vm818 = vmor %vm753, %vm786
  %vm819 = vmor %vm754, %vm787
  %vm820 = vmor %vm755, %vm788
  %vm821 = vmor %vm756, %vm789
  %vm822 = vmor %vm757, %vm790
  %vm823 = vmor %vm758, %vm791
  %vm824 = vmor %vm759, %vm792
  %vm825 = vmor %vm760, %vm793
  %vm826 = vmor %vm761, %vm794
  %vm827 = vmor %vm762, %vm795
  %vm828 = vmor %vm763, %vm796
  %vm829 = vmor %vm764, %vm797
  %vm830 = vmor %vm765, %vm798
  %vm831 = vmor %vm766, %vm799
  %vm832 = vmor %vm767, %vm800
  %vm833 = vmor %vm768, %vm801
  %v834 = vadd.s32 %v31, 64
  %vm835 = vcmp.eq.s32.totalorder %v364, %v834
  %vm836 = vcmp.eq.s32.totalorder %v365, %v834
  %vm837 = vcmp.eq.s32.totalorder %v366, %v834
  %vm838 = vcmp.eq.s32.totalorder %v367, %v834
  %vm839 = vcmp.eq.s32.totalorder %v368, %v834
  %vm840 = vcmp.eq.s32.totalorder %v369, %v834
  %vm841 = vcmp.eq.s32.totalorder %v370, %v834
  %vm842 = vcmp.eq.s32.totalorder %v371, %v834
  %vm843 = vcmp.eq.s32.totalorder %v372, %v834
  %vm844 = vcmp.eq.s32.totalorder %v373, %v834
  %vm845 = vcmp.eq.s32.totalorder %v374, %v834
  %vm846 = vcmp.eq.s32.totalorder %v375, %v834
  %vm847 = vcmp.eq.s32.totalorder %v376, %v834
  %vm848 = vcmp.eq.s32.totalorder %v377, %v834
  %vm849 = vcmp.eq.s32.totalorder %v378, %v834
  %vm850 = vcmp.eq.s32.totalorder %v379, %v834
  %vm851 = vcmp.eq.s32.totalorder %v380, %v834
  %vm852 = vcmp.eq.s32.totalorder %v381, %v834
  %vm853 = vcmp.eq.s32.totalorder %v382, %v834
  %vm854 = vcmp.eq.s32.totalorder %v383, %v834
  %vm855 = vcmp.eq.s32.totalorder %v384, %v834
  %vm856 = vcmp.eq.s32.totalorder %v385, %v834
  %vm857 = vcmp.eq.s32.totalorder %v386, %v834
  %vm858 = vcmp.eq.s32.totalorder %v387, %v834
  %vm859 = vcmp.eq.s32.totalorder %v388, %v834
  %vm860 = vcmp.eq.s32.totalorder %v389, %v834
  %vm861 = vcmp.eq.s32.totalorder %v390, %v834
  %vm862 = vcmp.eq.s32.totalorder %v391, %v834
  %vm863 = vcmp.eq.s32.totalorder %v392, %v834
  %vm864 = vcmp.eq.s32.totalorder %v393, %v834
  %vm865 = vcmp.eq.s32.totalorder %v394, %v834
  %vm866 = vcmp.eq.s32.totalorder %v395, %v834
  %vm867 = vmor %vm802, %vm835
  %vm868 = vmor %vm803, %vm836
  %vm869 = vmor %vm804, %vm837
  %vm870 = vmor %vm805, %vm838
  %vm871 = vmor %vm806, %vm839
  %vm872 = vmor %vm807, %vm840
  %vm873 = vmor %vm808, %vm841
  %vm874 = vmor %vm809, %vm842
  %vm875 = vmor %vm810, %vm843
  %vm876 = vmor %vm811, %vm844
  %vm877 = vmor %vm812, %vm845
  %vm878 = vmor %vm813, %vm846
  %vm879 = vmor %vm814, %vm847
  %vm880 = vmor %vm815, %vm848
  %vm881 = vmor %vm816, %vm849
  %vm882 = vmor %vm817, %vm850
  %vm883 = vmor %vm818, %vm851
  %vm884 = vmor %vm819, %vm852
  %vm885 = vmor %vm820, %vm853
  %vm886 = vmor %vm821, %vm854
  %vm887 = vmor %vm822, %vm855
  %vm888 = vmor %vm823, %vm856
  %vm889 = vmor %vm824, %vm857
  %vm890 = vmor %vm825, %vm858
  %vm891 = vmor %vm826, %vm859
  %vm892 = vmor %vm827, %vm860
  %vm893 = vmor %vm828, %vm861
  %vm894 = vmor %vm829, %vm862
  %vm895 = vmor %vm830, %vm863
  %vm896 = vmor %vm831, %vm864
  %vm897 = vmor %vm832, %vm865
  %vm898 = vmor %vm833, %vm866
  %v899 = vadd.s32 %v31, 96
  %vm900 = vcmp.eq.s32.totalorder %v364, %v899
  %vm901 = vcmp.eq.s32.totalorder %v365, %v899
  %vm902 = vcmp.eq.s32.totalorder %v366, %v899
  %vm903 = vcmp.eq.s32.totalorder %v367, %v899
  %vm904 = vcmp.eq.s32.totalorder %v368, %v899
  %vm905 = vcmp.eq.s32.totalorder %v369, %v899
  %vm906 = vcmp.eq.s32.totalorder %v370, %v899
  %vm907 = vcmp.eq.s32.totalorder %v371, %v899
  %vm908 = vcmp.eq.s32.totalorder %v372, %v899
  %vm909 = vcmp.eq.s32.totalorder %v373, %v899
  %vm910 = vcmp.eq.s32.totalorder %v374, %v899
  %vm911 = vcmp.eq.s32.totalorder %v375, %v899
  %vm912 = vcmp.eq.s32.totalorder %v376, %v899
  %vm913 = vcmp.eq.s32.totalorder %v377, %v899
  %vm914 = vcmp.eq.s32.totalorder %v378, %v899
  %vm915 = vcmp.eq.s32.totalorder %v379, %v899
  %vm916 = vcmp.eq.s32.totalorder %v380, %v899
  %vm917 = vcmp.eq.s32.totalorder %v381, %v899
  %vm918 = vcmp.eq.s32.totalorder %v382, %v899
  %vm919 = vcmp.eq.s32.totalorder %v383, %v899
  %vm920 = vcmp.eq.s32.totalorder %v384, %v899
  %vm921 = vcmp.eq.s32.totalorder %v385, %v899
  %vm922 = vcmp.eq.s32.totalorder %v386, %v899
  %vm923 = vcmp.eq.s32.totalorder %v387, %v899
  %vm924 = vcmp.eq.s32.totalorder %v388, %v899
  %vm925 = vcmp.eq.s32.totalorder %v389, %v899
  %vm926 = vcmp.eq.s32.totalorder %v390, %v899
  %vm927 = vcmp.eq.s32.totalorder %v391, %v899
  %vm928 = vcmp.eq.s32.totalorder %v392, %v899
  %vm929 = vcmp.eq.s32.totalorder %v393, %v899
  %vm930 = vcmp.eq.s32.totalorder %v394, %v899
  %vm931 = vcmp.eq.s32.totalorder %v395, %v899
  %vm932 = vmor %vm867, %vm900
  %vm933 = vmor %vm868, %vm901
  %vm934 = vmor %vm869, %vm902
  %vm935 = vmor %vm870, %vm903
  %vm936 = vmor %vm871, %vm904
  %vm937 = vmor %vm872, %vm905
  %vm938 = vmor %vm873, %vm906
  %vm939 = vmor %vm874, %vm907
  %vm940 = vmor %vm875, %vm908
  %vm941 = vmor %vm876, %vm909
  %vm942 = vmor %vm877, %vm910
  %vm943 = vmor %vm878, %vm911
  %vm944 = vmor %vm879, %vm912
  %vm945 = vmor %vm880, %vm913
  %vm946 = vmor %vm881, %vm914
  %vm947 = vmor %vm882, %vm915
  %vm948 = vmor %vm883, %vm916
  %vm949 = vmor %vm884, %vm917
  %vm950 = vmor %vm885, %vm918
  %vm951 = vmor %vm886, %vm919
  %vm952 = vmor %vm887, %vm920
  %vm953 = vmor %vm888, %vm921
  %vm954 = vmor %vm889, %vm922
  %vm955 = vmor %vm890, %vm923
  %vm956 = vmor %vm891, %vm924
  %vm957 = vmor %vm892, %vm925
  %vm958 = vmor %vm893, %vm926
  %vm959 = vmor %vm894, %vm927
  %vm960 = vmor %vm895, %vm928
  %vm961 = vmor %vm896, %vm929
  %vm962 = vmor %vm897, %vm930
  %vm963 = vmor %vm898, %vm931
  %vm964 = vcmp.eq.s32.totalorder %v364, %v648
  %vm965 = vcmp.eq.s32.totalorder %v365, %v648
  %vm966 = vcmp.eq.s32.totalorder %v366, %v648
  %vm967 = vcmp.eq.s32.totalorder %v367, %v648
  %vm968 = vcmp.eq.s32.totalorder %v368, %v648
  %vm969 = vcmp.eq.s32.totalorder %v369, %v648
  %vm970 = vcmp.eq.s32.totalorder %v370, %v648
  %vm971 = vcmp.eq.s32.totalorder %v371, %v648
  %vm972 = vcmp.eq.s32.totalorder %v372, %v648
  %vm973 = vcmp.eq.s32.totalorder %v373, %v648
  %vm974 = vcmp.eq.s32.totalorder %v374, %v648
  %vm975 = vcmp.eq.s32.totalorder %v375, %v648
  %vm976 = vcmp.eq.s32.totalorder %v376, %v648
  %vm977 = vcmp.eq.s32.totalorder %v377, %v648
  %vm978 = vcmp.eq.s32.totalorder %v378, %v648
  %vm979 = vcmp.eq.s32.totalorder %v379, %v648
  %vm980 = vcmp.eq.s32.totalorder %v380, %v648
  %vm981 = vcmp.eq.s32.totalorder %v381, %v648
  %vm982 = vcmp.eq.s32.totalorder %v382, %v648
  %vm983 = vcmp.eq.s32.totalorder %v383, %v648
  %vm984 = vcmp.eq.s32.totalorder %v384, %v648
  %vm985 = vcmp.eq.s32.totalorder %v385, %v648
  %vm986 = vcmp.eq.s32.totalorder %v386, %v648
  %vm987 = vcmp.eq.s32.totalorder %v387, %v648
  %vm988 = vcmp.eq.s32.totalorder %v388, %v648
  %vm989 = vcmp.eq.s32.totalorder %v389, %v648
  %vm990 = vcmp.eq.s32.totalorder %v390, %v648
  %vm991 = vcmp.eq.s32.totalorder %v391, %v648
  %vm992 = vcmp.eq.s32.totalorder %v392, %v648
  %vm993 = vcmp.eq.s32.totalorder %v393, %v648
  %vm994 = vcmp.eq.s32.totalorder %v394, %v648
  %vm995 = vcmp.eq.s32.totalorder %v395, %v648
  %vm996 = vmor %vm932, %vm964
  %vm997 = vmor %vm933, %vm965
  %vm998 = vmor %vm934, %vm966
  %vm999 = vmor %vm935, %vm967
  %vm1000 = vmor %vm936, %vm968
  %vm1001 = vmor %vm937, %vm969
  %vm1002 = vmor %vm938, %vm970
  %vm1003 = vmor %vm939, %vm971
  %vm1004 = vmor %vm940, %vm972
  %vm1005 = vmor %vm941, %vm973
  %vm1006 = vmor %vm942, %vm974
  %vm1007 = vmor %vm943, %vm975
  %vm1008 = vmor %vm944, %vm976
  %vm1009 = vmor %vm945, %vm977
  %vm1010 = vmor %vm946, %vm978
  %vm1011 = vmor %vm947, %vm979
  %vm1012 = vmor %vm948, %vm980
  %vm1013 = vmor %vm949, %vm981
  %vm1014 = vmor %vm950, %vm982
  %vm1015 = vmor %vm951, %vm983
  %vm1016 = vmor %vm952, %vm984
  %vm1017 = vmor %vm953, %vm985
  %vm1018 = vmor %vm954, %vm986
  %vm1019 = vmor %vm955, %vm987
  %vm1020 = vmor %vm956, %vm988
  %vm1021 = vmor %vm957, %vm989
  %vm1022 = vmor %vm958, %vm990
  %vm1023 = vmor %vm959, %vm991
  %vm1024 = vmor %vm960, %vm992
  %vm1025 = vmor %vm961, %vm993
  %vm1026 = vmor %vm962, %vm994
  %vm1027 = vmor %vm963, %vm995
  %v1028 = vadd.s32 %v31, 160
  %vm1029 = vcmp.eq.s32.totalorder %v364, %v1028
  %vm1030 = vcmp.eq.s32.totalorder %v365, %v1028
  %vm1031 = vcmp.eq.s32.totalorder %v366, %v1028
  %vm1032 = vcmp.eq.s32.totalorder %v367, %v1028
  %vm1033 = vcmp.eq.s32.totalorder %v368, %v1028
  %vm1034 = vcmp.eq.s32.totalorder %v369, %v1028
  %vm1035 = vcmp.eq.s32.totalorder %v370, %v1028
  %vm1036 = vcmp.eq.s32.totalorder %v371, %v1028
  %vm1037 = vcmp.eq.s32.totalorder %v372, %v1028
  %vm1038 = vcmp.eq.s32.totalorder %v373, %v1028
  %vm1039 = vcmp.eq.s32.totalorder %v374, %v1028
  %vm1040 = vcmp.eq.s32.totalorder %v375, %v1028
  %vm1041 = vcmp.eq.s32.totalorder %v376, %v1028
  %vm1042 = vcmp.eq.s32.totalorder %v377, %v1028
  %vm1043 = vcmp.eq.s32.totalorder %v378, %v1028
  %vm1044 = vcmp.eq.s32.totalorder %v379, %v1028
  %vm1045 = vcmp.eq.s32.totalorder %v380, %v1028
  %vm1046 = vcmp.eq.s32.totalorder %v381, %v1028
  %vm1047 = vcmp.eq.s32.totalorder %v382, %v1028
  %vm1048 = vcmp.eq.s32.totalorder %v383, %v1028
  %vm1049 = vcmp.eq.s32.totalorder %v384, %v1028
  %vm1050 = vcmp.eq.s32.totalorder %v385, %v1028
  %vm1051 = vcmp.eq.s32.totalorder %v386, %v1028
  %vm1052 = vcmp.eq.s32.totalorder %v387, %v1028
  %vm1053 = vcmp.eq.s32.totalorder %v388, %v1028
  %vm1054 = vcmp.eq.s32.totalorder %v389, %v1028
  %vm1055 = vcmp.eq.s32.totalorder %v390, %v1028
  %vm1056 = vcmp.eq.s32.totalorder %v391, %v1028
  %vm1057 = vcmp.eq.s32.totalorder %v392, %v1028
  %vm1058 = vcmp.eq.s32.totalorder %v393, %v1028
  %vm1059 = vcmp.eq.s32.totalorder %v394, %v1028
  %vm1060 = vcmp.eq.s32.totalorder %v395, %v1028
  %vm1061 = vmor %vm996, %vm1029
  %vm1062 = vmor %vm997, %vm1030
  %vm1063 = vmor %vm998, %vm1031
  %vm1064 = vmor %vm999, %vm1032
  %vm1065 = vmor %vm1000, %vm1033
  %vm1066 = vmor %vm1001, %vm1034
  %vm1067 = vmor %vm1002, %vm1035
  %vm1068 = vmor %vm1003, %vm1036
  %vm1069 = vmor %vm1004, %vm1037
  %vm1070 = vmor %vm1005, %vm1038
  %vm1071 = vmor %vm1006, %vm1039
  %vm1072 = vmor %vm1007, %vm1040
  %vm1073 = vmor %vm1008, %vm1041
  %vm1074 = vmor %vm1009, %vm1042
  %vm1075 = vmor %vm1010, %vm1043
  %vm1076 = vmor %vm1011, %vm1044
  %vm1077 = vmor %vm1012, %vm1045
  %vm1078 = vmor %vm1013, %vm1046
  %vm1079 = vmor %vm1014, %vm1047
  %vm1080 = vmor %vm1015, %vm1048
  %vm1081 = vmor %vm1016, %vm1049
  %vm1082 = vmor %vm1017, %vm1050
  %vm1083 = vmor %vm1018, %vm1051
  %vm1084 = vmor %vm1019, %vm1052
  %vm1085 = vmor %vm1020, %vm1053
  %vm1086 = vmor %vm1021, %vm1054
  %vm1087 = vmor %vm1022, %vm1055
  %vm1088 = vmor %vm1023, %vm1056
  %vm1089 = vmor %vm1024, %vm1057
  %vm1090 = vmor %vm1025, %vm1058
  %vm1091 = vmor %vm1026, %vm1059
  %vm1092 = vmor %vm1027, %vm1060
  %v1093 = vadd.s32 %v31, 192
  %vm1094 = vcmp.eq.s32.totalorder %v364, %v1093
  %vm1095 = vcmp.eq.s32.totalorder %v365, %v1093
  %vm1096 = vcmp.eq.s32.totalorder %v366, %v1093
  %vm1097 = vcmp.eq.s32.totalorder %v367, %v1093
  %vm1098 = vcmp.eq.s32.totalorder %v368, %v1093
  %vm1099 = vcmp.eq.s32.totalorder %v369, %v1093
  %vm1100 = vcmp.eq.s32.totalorder %v370, %v1093
  %vm1101 = vcmp.eq.s32.totalorder %v371, %v1093
  %vm1102 = vcmp.eq.s32.totalorder %v372, %v1093
  %vm1103 = vcmp.eq.s32.totalorder %v373, %v1093
  %vm1104 = vcmp.eq.s32.totalorder %v374, %v1093
  %vm1105 = vcmp.eq.s32.totalorder %v375, %v1093
  %vm1106 = vcmp.eq.s32.totalorder %v376, %v1093
  %vm1107 = vcmp.eq.s32.totalorder %v377, %v1093
  %vm1108 = vcmp.eq.s32.totalorder %v378, %v1093
  %vm1109 = vcmp.eq.s32.totalorder %v379, %v1093
  %vm1110 = vcmp.eq.s32.totalorder %v380, %v1093
  %vm1111 = vcmp.eq.s32.totalorder %v381, %v1093
  %vm1112 = vcmp.eq.s32.totalorder %v382, %v1093
  %vm1113 = vcmp.eq.s32.totalorder %v383, %v1093
  %vm1114 = vcmp.eq.s32.totalorder %v384, %v1093
  %vm1115 = vcmp.eq.s32.totalorder %v385, %v1093
  %vm1116 = vcmp.eq.s32.totalorder %v386, %v1093
  %vm1117 = vcmp.eq.s32.totalorder %v387, %v1093
  %vm1118 = vcmp.eq.s32.totalorder %v388, %v1093
  %vm1119 = vcmp.eq.s32.totalorder %v389, %v1093
  %vm1120 = vcmp.eq.s32.totalorder %v390, %v1093
  %vm1121 = vcmp.eq.s32.totalorder %v391, %v1093
  %vm1122 = vcmp.eq.s32.totalorder %v392, %v1093
  %vm1123 = vcmp.eq.s32.totalorder %v393, %v1093
  %vm1124 = vcmp.eq.s32.totalorder %v394, %v1093
  %vm1125 = vcmp.eq.s32.totalorder %v395, %v1093
  %vm1126 = vmor %vm1061, %vm1094
  %vm1127 = vmor %vm1062, %vm1095
  %vm1128 = vmor %vm1063, %vm1096
  %vm1129 = vmor %vm1064, %vm1097
  %vm1130 = vmor %vm1065, %vm1098
  %vm1131 = vmor %vm1066, %vm1099
  %vm1132 = vmor %vm1067, %vm1100
  %vm1133 = vmor %vm1068, %vm1101
  %vm1134 = vmor %vm1069, %vm1102
  %vm1135 = vmor %vm1070, %vm1103
  %vm1136 = vmor %vm1071, %vm1104
  %vm1137 = vmor %vm1072, %vm1105
  %vm1138 = vmor %vm1073, %vm1106
  %vm1139 = vmor %vm1074, %vm1107
  %vm1140 = vmor %vm1075, %vm1108
  %vm1141 = vmor %vm1076, %vm1109
  %vm1142 = vmor %vm1077, %vm1110
  %vm1143 = vmor %vm1078, %vm1111
  %vm1144 = vmor %vm1079, %vm1112
  %vm1145 = vmor %vm1080, %vm1113
  %vm1146 = vmor %vm1081, %vm1114
  %vm1147 = vmor %vm1082, %vm1115
  %vm1148 = vmor %vm1083, %vm1116
  %vm1149 = vmor %vm1084, %vm1117
  %vm1150 = vmor %vm1085, %vm1118
  %vm1151 = vmor %vm1086, %vm1119
  %vm1152 = vmor %vm1087, %vm1120
  %vm1153 = vmor %vm1088, %vm1121
  %vm1154 = vmor %vm1089, %vm1122
  %vm1155 = vmor %vm1090, %vm1123
  %vm1156 = vmor %vm1091, %vm1124
  %vm1157 = vmor %vm1092, %vm1125
  %v1158 = vadd.s32 %v31, 224
  %vm1159 = vcmp.eq.s32.totalorder %v364, %v1158
  %vm1160 = vcmp.eq.s32.totalorder %v365, %v1158
  %vm1161 = vcmp.eq.s32.totalorder %v366, %v1158
  %vm1162 = vcmp.eq.s32.totalorder %v367, %v1158
  %vm1163 = vcmp.eq.s32.totalorder %v368, %v1158
  %vm1164 = vcmp.eq.s32.totalorder %v369, %v1158
  %vm1165 = vcmp.eq.s32.totalorder %v370, %v1158
  %vm1166 = vcmp.eq.s32.totalorder %v371, %v1158
  %vm1167 = vcmp.eq.s32.totalorder %v372, %v1158
  %vm1168 = vcmp.eq.s32.totalorder %v373, %v1158
  %vm1169 = vcmp.eq.s32.totalorder %v374, %v1158
  %vm1170 = vcmp.eq.s32.totalorder %v375, %v1158
  %vm1171 = vcmp.eq.s32.totalorder %v376, %v1158
  %vm1172 = vcmp.eq.s32.totalorder %v377, %v1158
  %vm1173 = vcmp.eq.s32.totalorder %v378, %v1158
  %vm1174 = vcmp.eq.s32.totalorder %v379, %v1158
  %vm1175 = vcmp.eq.s32.totalorder %v380, %v1158
  %vm1176 = vcmp.eq.s32.totalorder %v381, %v1158
  %vm1177 = vcmp.eq.s32.totalorder %v382, %v1158
  %vm1178 = vcmp.eq.s32.totalorder %v383, %v1158
  %vm1179 = vcmp.eq.s32.totalorder %v384, %v1158
  %vm1180 = vcmp.eq.s32.totalorder %v385, %v1158
  %vm1181 = vcmp.eq.s32.totalorder %v386, %v1158
  %vm1182 = vcmp.eq.s32.totalorder %v387, %v1158
  %vm1183 = vcmp.eq.s32.totalorder %v388, %v1158
  %vm1184 = vcmp.eq.s32.totalorder %v389, %v1158
  %vm1185 = vcmp.eq.s32.totalorder %v390, %v1158
  %vm1186 = vcmp.eq.s32.totalorder %v391, %v1158
  %vm1187 = vcmp.eq.s32.totalorder %v392, %v1158
  %vm1188 = vcmp.eq.s32.totalorder %v393, %v1158
  %vm1189 = vcmp.eq.s32.totalorder %v394, %v1158
  %vm1190 = vcmp.eq.s32.totalorder %v395, %v1158
  %vm1191 = vmor %vm1126, %vm1159
  %vm1192 = vmor %vm1127, %vm1160
  %vm1193 = vmor %vm1128, %vm1161
  %vm1194 = vmor %vm1129, %vm1162
  %vm1195 = vmor %vm1130, %vm1163
  %vm1196 = vmor %vm1131, %vm1164
  %vm1197 = vmor %vm1132, %vm1165
  %vm1198 = vmor %vm1133, %vm1166
  %vm1199 = vmor %vm1134, %vm1167
  %vm1200 = vmor %vm1135, %vm1168
  %vm1201 = vmor %vm1136, %vm1169
  %vm1202 = vmor %vm1137, %vm1170
  %vm1203 = vmor %vm1138, %vm1171
  %vm1204 = vmor %vm1139, %vm1172
  %vm1205 = vmor %vm1140, %vm1173
  %vm1206 = vmor %vm1141, %vm1174
  %vm1207 = vmor %vm1142, %vm1175
  %vm1208 = vmor %vm1143, %vm1176
  %vm1209 = vmor %vm1144, %vm1177
  %vm1210 = vmor %vm1145, %vm1178
  %vm1211 = vmor %vm1146, %vm1179
  %vm1212 = vmor %vm1147, %vm1180
  %vm1213 = vmor %vm1148, %vm1181
  %vm1214 = vmor %vm1149, %vm1182
  %vm1215 = vmor %vm1150, %vm1183
  %vm1216 = vmor %vm1151, %vm1184
  %vm1217 = vmor %vm1152, %vm1185
  %vm1218 = vmor %vm1153, %vm1186
  %vm1219 = vmor %vm1154, %vm1187
  %vm1220 = vmor %vm1155, %vm1188
  %vm1221 = vmor %vm1156, %vm1189
  %vm1222 = vmor %vm1157, %vm1190
  %v1223 = vsel %vm1191, 1, 0
  %v1224 = vsel %vm1192, 1, 0
  %v1225 = vsel %vm1193, 1, 0
  %v1226 = vsel %vm1194, 1, 0
  %v1227 = vsel %vm1195, 1, 0
  %v1228 = vsel %vm1196, 1, 0
  %v1229 = vsel %vm1197, 1, 0
  %v1230 = vsel %vm1198, 1, 0
  %v1231 = vsel %vm1199, 1, 0
  %v1232 = vsel %vm1200, 1, 0
  %v1233 = vsel %vm1201, 1, 0
  %v1234 = vsel %vm1202, 1, 0
  %v1235 = vsel %vm1203, 1, 0
  %v1236 = vsel %vm1204, 1, 0
  %v1237 = vsel %vm1205, 1, 0
  %v1238 = vsel %vm1206, 1, 0
  %v1239 = vsel %vm1207, 1, 0
  %v1240 = vsel %vm1208, 1, 0
  %v1241 = vsel %vm1209, 1, 0
  %v1242 = vsel %vm1210, 1, 0
  %v1243 = vsel %vm1211, 1, 0
  %v1244 = vsel %vm1212, 1, 0
  %v1245 = vsel %vm1213, 1, 0
  %v1246 = vsel %vm1214, 1, 0
  %v1247 = vsel %vm1215, 1, 0
  %v1248 = vsel %vm1216, 1, 0
  %v1249 = vsel %vm1217, 1, 0
  %v1250 = vsel %vm1218, 1, 0
  %v1251 = vsel %vm1219, 1, 0
  %v1252 = vsel %vm1220, 1, 0
  %v1253 = vsel %vm1221, 1, 0
  %v1254 = vsel %vm1222, 1, 0
  %v1255 = vcvt.s32.f32 %v1223
  %v1256 = vcvt.s32.f32 %v1224
  %v1257 = vcvt.s32.f32 %v1225
  %v1258 = vcvt.s32.f32 %v1226
  %v1259 = vcvt.s32.f32 %v1227
  %v1260 = vcvt.s32.f32 %v1228
  %v1261 = vcvt.s32.f32 %v1229
  %v1262 = vcvt.s32.f32 %v1230
  %v1263 = vcvt.s32.f32 %v1231
  %v1264 = vcvt.s32.f32 %v1232
  %v1265 = vcvt.s32.f32 %v1233
  %v1266 = vcvt.s32.f32 %v1234
  %v1267 = vcvt.s32.f32 %v1235
  %v1268 = vcvt.s32.f32 %v1236
  %v1269 = vcvt.s32.f32 %v1237
  %v1270 = vcvt.s32.f32 %v1238
  %v1271 = vcvt.s32.f32 %v1239
  %v1272 = vcvt.s32.f32 %v1240
  %v1273 = vcvt.s32.f32 %v1241
  %v1274 = vcvt.s32.f32 %v1242
  %v1275 = vcvt.s32.f32 %v1243
  %v1276 = vcvt.s32.f32 %v1244
  %v1277 = vcvt.s32.f32 %v1245
  %v1278 = vcvt.s32.f32 %v1246
  %v1279 = vcvt.s32.f32 %v1247
  %v1280 = vcvt.s32.f32 %v1248
  %v1281 = vcvt.s32.f32 %v1249
  %v1282 = vcvt.s32.f32 %v1250
  %v1283 = vcvt.s32.f32 %v1251
  %v1284 = vcvt.s32.f32 %v1252
  %v1285 = vcvt.s32.f32 %v1253
  %v1286 = vcvt.s32.f32 %v1254
  %v1288 = vcombine.high %v348, %v348
  %v1290 = vmul.f32 %v733, %v348
  %v1291 = vmul.f32 %v735, %v1288
  %1292 = vmatprep.subr.mxu0 0.0
  %1293 = vmatpush1.msra.mxu0 %v1255
  %1294 = vmatprep.subr.mxu0 0.0
  %1295 = vmatpush1.msra.mxu0 %v1256
  %1296 = vmatprep.subr.mxu0 0.0
  %1297 = vmatpush1.msra.mxu0 %v1257
  %1298 = vmatprep.subr.mxu0 0.0
  %1299 = vmatpush1.msra.mxu0 %v1258
  %1300 = vmatprep.subr.mxu0 0.0
  %1301 = vmatpush1.msra.mxu0 %v1259
  %1302 = vmatprep.subr.mxu0 0.0
  %1303 = vmatpush1.msra.mxu0 %v1260
  %1304 = vmatprep.subr.mxu0 0.0
  %1305 = vmatpush1.msra.mxu0 %v1261
  %1306 = vmatprep.subr.mxu0 0.0
  %1307 = vmatpush1.msra.mxu0 %v1262
  %1308 = vmatprep.subr.mxu0 0.0
  %1309 = vmatpush1.msra.mxu0 %v1263
  %1310 = vmatprep.subr.mxu0 0.0
  %1311 = vmatpush1.msra.mxu0 %v1264
  %1312 = vmatprep.subr.mxu0 0.0
  %1313 = vmatpush1.msra.mxu0 %v1265
  %1314 = vmatprep.subr.mxu0 0.0
  %1315 = vmatpush1.msra.mxu0 %v1266
  %1316 = vmatprep.subr.mxu0 0.0
  %1317 = vmatpush1.msra.mxu0 %v1267
  %1318 = vmatprep.subr.mxu0 0.0
  %1319 = vmatpush1.msra.mxu0 %v1268
  %1320 = vmatprep.subr.mxu0 0.0
  %1321 = vmatpush1.msra.mxu0 %v1269
  %1322 = vmatprep.subr.mxu0 0.0
  %1323 = vmatpush1.msra.mxu0 %v1270
  %1324 = vmatprep.subr.mxu0 0.0
  %1325 = vmatpush1.msra.mxu0 %v1271
  %1326 = vmatprep.subr.mxu0 0.0
  %1327 = vmatpush1.msra.mxu0 %v1272
  %1328 = vmatprep.subr.mxu0 0.0
  %1329 = vmatpush1.msra.mxu0 %v1273
  %1330 = vmatprep.subr.mxu0 0.0
  %1331 = vmatpush1.msra.mxu0 %v1274
  %1332 = vmatprep.subr.mxu0 0.0
  %1333 = vmatpush1.msra.mxu0 %v1275
  %1334 = vmatprep.subr.mxu0 0.0
  %1335 = vmatpush1.msra.mxu0 %v1276
  %1336 = vmatprep.subr.mxu0 0.0
  %1337 = vmatpush1.msra.mxu0 %v1277
  %1338 = vmatprep.subr.mxu0 0.0
  %1339 = vmatpush1.msra.mxu0 %v1278
  %1340 = vmatprep.subr.mxu0 0.0
  %1341 = vmatpush1.msra.mxu0 %v1279
  %1342 = vmatprep.subr.mxu0 0.0
  %1343 = vmatpush1.msra.mxu0 %v1280
  %1344 = vmatprep.subr.mxu0 0.0
  %1345 = vmatpush1.msra.mxu0 %v1281
  %1346 = vmatprep.subr.mxu0 0.0
  %1347 = vmatpush1.msra.mxu0 %v1282
  %1348 = vmatprep.subr.mxu0 0.0
  %1349 = vmatpush1.msra.mxu0 %v1283
  %1350 = vmatprep.subr.mxu0 0.0
  %1351 = vmatpush1.msra.mxu0 %v1284
  %1352 = vmatprep.subr.mxu0 0.0
  %1353 = vmatpush1.msra.mxu0 %v1285
  %1354 = vmatprep.subr.mxu0 0.0
  %1355 = vmatpush1.msra.mxu0 %v1286
  %1356 = vmatprep.mubr.f32.mxu0 %v1291
  %1357 = vmatmul.mubr.f32.gmra.mrb[0].mxu0 %v1290
  %v1358 = vpop.f32.mrb[0].mxu0
  %v1359 = vadd.f32 0.0, %v1358
  %v1360 = vpop.f32.mrb[0].mxu0
  %1361 = vdwg.mxu0
  %v1362 = vpack.c.bf16 %v347, %v347
  %v1363 = vpack.c.bf16 %v1359, %v1359
  %1365 = vrot.lane.b32.xlu0 %v1362, 32
  %v1366 = vpop.permute.xlu0 %1365
  %1368 = vrot.lane.b32.xlu0 %v1363, 32
  %v1369 = vpop.permute.xlu0 %1368
  %v1372 = vsel %vm241, %v1366, %v1369
  %v1373 = vsel %vm245, %v1372, 1065369472
  %v1374 = vld [vmem:[%s5] sm:$0xf]
  %v1375 = vld [vmem:[%s5 + $0x4] sm:$0xf]
  %v1376 = vld [vmem:[%s5 + $0x8] sm:$0xf]
  %v1377 = vld [vmem:[%s5 + $0xc] sm:$0xf]
  %v1378 = vld [vmem:[%s5 + $0x10] sm:$0xf]
  %v1379 = vld [vmem:[%s5 + $0x14] sm:$0xf]
  %v1380 = vld [vmem:[%s5 + $0x18] sm:$0xf]
  %v1381 = vld [vmem:[%s5 + $0x1c] sm:$0xf]
  %v1382 = vld [vmem:[%s5 + $0x20] sm:$0x1]
  %v1392 = vunpack.c.l.b16 %v1374
  %v1393 = vunpack.c.l.b16 %v1375
  %v1394 = vunpack.c.l.b16 %v1376
  %v1395 = vunpack.c.l.b16 %v1377
  %v1396 = vunpack.c.l.b16 %v1378
  %v1397 = vunpack.c.l.b16 %v1379
  %v1398 = vunpack.c.l.b16 %v1380
  %v1399 = vunpack.c.l.b16 %v1381
  %v1400 = vunpack.c.l.b16 %v1382
  %v1401 = vpack.c.b16 %v1393, %v1392
  %v1402 = vpack.c.b16 %v1395, %v1394
  %v1403 = vpack.c.b16 %v1397, %v1396
  %v1404 = vpack.c.b16 %v1399, %v1398
  %v1405 = vpack.c.b16 %v1400, %v1400
  %v1410 = vsel %vm247, %v1373, 0
  %vm1412 = vcmask 1040384
  %v1413 = vsel 0, 4294967295, 65535
  %v1414 = vsel %vm1412, %v1413, 0
  %v1416 = vand.u32 %v1405, %v1414
  %1418 = vmatprep.subr.bf16.mxu0 0
  %1419 = vmatpush1.bf16.msra.mxu0 %v1401
  %1420 = vmatprep.subr.bf16.mxu0 0
  %1421 = vmatpush1.bf16.msra.mxu0 %v1402
  %1422 = vmatprep.subr.bf16.mxu0 0
  %1423 = vmatpush1.bf16.msra.mxu0 %v1403
  %1424 = vmatprep.subr.bf16.mxu0 0
  %1425 = vmatpush1.bf16.msra.mxu0 %v1404
  %1426 = vmatprep.subr.bf16.mxu0 0
  %1427 = vmatpush1.bf16.msra.mxu0 %v1416
  %1428 = vmatprep.subr.bf16.mxu0 0
  %1429 = vmatpush1.bf16.msra.mxu0 0
  %1430 = vmatprep.subr.bf16.mxu0 0
  %1431 = vmatpush1.bf16.msra.mxu0 0
  %1432 = vmatprep.subr.bf16.mxu0 0
  %1433 = vmatpush1.bf16.msra.mxu0 0
  %1434 = vmatprep.subr.bf16.mxu0 0
  %1435 = vmatpush1.bf16.msra.mxu0 0
  %1436 = vmatprep.subr.bf16.mxu0 0
  %1437 = vmatpush1.bf16.msra.mxu0 0
  %1438 = vmatprep.subr.bf16.mxu0 0
  %1439 = vmatpush1.bf16.msra.mxu0 0
  %1440 = vmatprep.subr.bf16.mxu0 0
  %1441 = vmatpush1.bf16.msra.mxu0 0
  %1442 = vmatprep.subr.bf16.mxu0 0
  %1443 = vmatpush1.bf16.msra.mxu0 0
  %1444 = vmatprep.subr.bf16.mxu0 0
  %1445 = vmatpush1.bf16.msra.mxu0 0
  %1446 = vmatprep.subr.bf16.mxu0 0
  %1447 = vmatpush1.bf16.msra.mxu0 0
  %1448 = vmatprep.subr.bf16.mxu0 0
  %1449 = vmatpush1.bf16.msra.mxu0 0
  %1450 = vmatprep.mubr.bf16.mxu0 0
  %1451 = vmatmul.mubr.bf16.gmra.mrb[0].mxu0 %v1410
  %v1452 = vpop.f32.mrb[0].mxu0
  %v1453 = vadd.f32 0.0, %v1452
  %v1454 = vpop.f32.mrb[0].mxu0
  %v1455 = vpop.f32.mrb[0].mxu0
  %v1456 = vpop.f32.mrb[0].mxu0
  %1457 = vdwg.mxu0
  %v1458 = vtanh.pop %v1453
  %v1459 = vpack.c.bf16 %v1458, %v1458
  %v1461 = vsel %vm241, %v1459, 1065369472
  %v1462 = vld [vmem:[%s6] sm:$0xf]
  %v1463 = vld [vmem:[%s6 + $0x4] sm:$0xf]
  %v1464 = vld [vmem:[%s6 + $0x8] sm:$0xf]
  %v1465 = vld [vmem:[%s6 + $0xc] sm:$0xf]
  %v1466 = vld [vmem:[%s6 + $0x10] sm:$0x1]
  %v1472 = vunpack.c.l.b16 %v1462
  %v1473 = vunpack.c.l.b16 %v1463
  %v1474 = vunpack.c.l.b16 %v1464
  %v1475 = vunpack.c.l.b16 %v1465
  %v1476 = vunpack.c.l.b16 %v1466
  %v1477 = vpack.c.b16 %v1473, %v1472
  %v1478 = vpack.c.b16 %v1475, %v1474
  %v1479 = vpack.c.b16 %v1476, %v1476
  %vm1482 = vcmask 269312
  %v1483 = vsel %vm1482, %v1461, 0
  %v1486 = vand.u32 %v1479, %v1414
  %1488 = vmatprep.subr.bf16.mxu0 0
  %1489 = vmatpush1.bf16.msra.mxu0 %v1477
  %1490 = vmatprep.subr.bf16.mxu0 0
  %1491 = vmatpush1.bf16.msra.mxu0 %v1478
  %1492 = vmatprep.subr.bf16.mxu0 0
  %1493 = vmatpush1.bf16.msra.mxu0 %v1486
  %1494 = vmatprep.subr.bf16.mxu0 0
  %1495 = vmatpush1.bf16.msra.mxu0 0
  %1496 = vmatprep.subr.bf16.mxu0 0
  %1497 = vmatpush1.bf16.msra.mxu0 0
  %1498 = vmatprep.subr.bf16.mxu0 0
  %1499 = vmatpush1.bf16.msra.mxu0 0
  %1500 = vmatprep.subr.bf16.mxu0 0
  %1501 = vmatpush1.bf16.msra.mxu0 0
  %1502 = vmatprep.subr.bf16.mxu0 0
  %1503 = vmatpush1.bf16.msra.mxu0 0
  %1504 = vmatprep.subr.bf16.mxu0 0
  %1505 = vmatpush1.bf16.msra.mxu0 0
  %1506 = vmatprep.subr.bf16.mxu0 0
  %1507 = vmatpush1.bf16.msra.mxu0 0
  %1508 = vmatprep.subr.bf16.mxu0 0
  %1509 = vmatpush1.bf16.msra.mxu0 0
  %1510 = vmatprep.subr.bf16.mxu0 0
  %1511 = vmatpush1.bf16.msra.mxu0 0
  %1512 = vmatprep.subr.bf16.mxu0 0
  %1513 = vmatpush1.bf16.msra.mxu0 0
  %1514 = vmatprep.subr.bf16.mxu0 0
  %1515 = vmatpush1.bf16.msra.mxu0 0
  %1516 = vmatprep.subr.bf16.mxu0 0
  %1517 = vmatpush1.bf16.msra.mxu0 0
  %1518 = vmatprep.subr.bf16.mxu0 0
  %1519 = vmatpush1.bf16.msra.mxu0 0
  %1520 = vmatprep.mubr.bf16.mxu0 0
  %1521 = vmatmul.mubr.bf16.gmra.mrb[0].mxu0 %v1483
  %v1522 = vpop.f32.mrb[0].mxu0
  %v1523 = vadd.f32 0.0, %v1522
  %v1524 = vpop.f32.mrb[0].mxu0
  %v1525 = vpop.f32.mrb[0].mxu0
  %v1526 = vpop.f32.mrb[0].mxu0
  %1527 = vdwg.mxu0
  %vm1528 = vcmask 191488
  %v1529 = vsel %vm1528, %v1523, -inf
  %1530 = vmax.xlane.f32.xlu0 %v1529
  %v1531 = vpop.xlane.xlu0 %1530
  %v1532 = vsub.f32 %v1523, %v1531
  %v1533 = vmul.f32 %v1532, 1.442695
  %v1534 = vpow.pop %v1533
  %v1535 = vsel %vm1528, %v1534, 0.0
  %1536 = vadd.xlane.f32.xlu0 %v1535
  %v1537 = vpop.xlane.xlu0 %1536
  %v1538 = vlog2.pop %v1537
  %v1539 = vmul.f32 %v1538, 0.6931472
  %v1540 = vsub.f32 %v1532, %v1539
  %1541 = vrot.lane.b32.xlu0 %v647, 24
  %v1542 = vpop.permute.xlu0 %1541
  %v1544 = vsel %vm52, %v1540, %v1542
  %v1545 = vsel %vm241, %v1544, 0.0
  %1546 = vst [vmem:[%s7] sm:$0xf] %v1545
  %1548 = vrot.lane.b32.xlu0 %v226, 32
  %v1549 = vpop.permute.xlu0 %1548
  %1552 = vrot.lane.b32.xlu0 %v220, 32
  %v1553 = vpop.permute.xlu0 %1552
  %1556 = vrot.lane.b32.xlu0 %v341, 64
  %v1557 = vpop.permute.xlu0 %1556
  %v1559 = vsel %vm241, %v1549, %v354
  %v1560 = vsel %vm245, %v1559, %v1553
  %v1561 = vsel %vm361, %v1560, %v1557
  %1562 = vst [vmem:[%s8] sm:$0xf] %v1561
  // Predicated region
  $region30: #{decoder_attention_forward.1} parent=0 // pred_check
    _
  $region31: #{decoder_attention_forward.1} parent=0 // pred_check_branch
    %1564 = sbr.rel (0) target = $region33
  $region32: #{decoder_attention_forward.1} parent=0 // pred_region
    _
  $region33: #{decoder_attention_forward.1} parent=0 // pred_fallthru
    _
  // Predicated region
  $region34: #{decoder_attention_forward.1} parent=0 // pred_check
    _
  $region35: #{decoder_attention_forward.1} parent=0 // pred_check_branch
    %1566 = sbr.rel (0) target = $region37
  $region36: #{decoder_attention_forward.1} parent=0 // pred_region
    _
  $region37: #{decoder_attention_forward.1} parent=0 // pred_fallthru
    _
  // Predicated region
  $region38: #{decoder_attention_forward.1} parent=0 // pred_check
    _
  $region39: #{decoder_attention_forward.1} parent=0 // pred_check_branch
    %1568 = sbr.rel (0) target = $region41
  $region40: #{decoder_attention_forward.1} parent=0 // pred_region
    _
  $region41: #{decoder_attention_forward.1} parent=0 // pred_fallthru
    _
  // Predicated region
  $region42: #{decoder_attention_forward.1} parent=0 // pred_check
    _
  $region43: #{decoder_attention_forward.1} parent=0 // pred_check_branch
    %1570 = sbr.rel (0) target = $region45
  $region44: #{decoder_attention_forward.1} parent=0 // pred_region
    _
  $region45: #{decoder_attention_forward.1} parent=0 // pred_fallthru
    _

</llo_original>
